<compile_context>
chip_gen: v6e
topology: v6e:2x2x1
jax: 0.10.0
libtpu: 0.0.40
codegen_flags: <defaults>
</compile_context>

<pallas_src>
import functools
import inspect

import jax
import jax.numpy as jnp
from jax.experimental import pallas as pl
from jax.experimental.pallas import tpu as pltpu


def _round_up(a, b):
    return (a + b - 1) // b * b


def _supports_buffered_blockspec():
    """Capability check for pl.BlockSpec(pipeline_mode=pl.Buffered(n))."""
    if not hasattr(pl, "Buffered"):
        return False
    try:
        return "pipeline_mode" in inspect.signature(pl.BlockSpec).parameters
    except (TypeError, ValueError):
        return False


def _vmem_capacity_bytes():
    """Physical VMEM per core; conservative default if the query is absent."""
    try:
        return int(pltpu.get_tpu_info().vmem_capacity_bytes)
    except Exception:
        return 64 << 20  # v7x-sized conservative default


def ae_kernel(x_ref,
              w1, b1, w2, b2, w3, b3, wz, bz,
              w4, b4, w5, b5, w6, b6, wx, bx,
              out_ref, *, compute_dtype, offs):
    """One batch tile of the fused AE forward. All feature dims 128-padded."""
    o_xb, o_h1, o_h2, o_h3, o_z = offs

    def linear(x_c, w_ref, b_ref, relu):
        # MXU matmul with f32 accumulation; bias-add + ReLU in f32 on the VPU.
        y = jnp.dot(x_c, w_ref[...], preferred_element_type=jnp.float32)
        y = y + b_ref[...]
        return jnp.maximum(y, 0.0) if relu else y

    def emit(col, y_f32):
        # Direct 128-aligned section store (unmasked vst), no concat copy.
        out_ref[:, col:col + y_f32.shape[1]] = y_f32.astype(out_ref.dtype)

    x = x_ref[...].astype(compute_dtype)            # single cast of the input
    # Encoder
    h1 = linear(x, w1, b1, True)
    emit(o_h1, h1)
    h2 = linear(h1.astype(compute_dtype), w2, b2, True)
    emit(o_h2, h2)
    h3 = linear(h2.astype(compute_dtype), w3, b3, True)
    emit(o_h3, h3)
    z = linear(h3.astype(compute_dtype), wz, bz, False)
    emit(o_z, z)
    # Decoder
    d1 = linear(z.astype(compute_dtype), w4, b4, True)
    d2 = linear(d1.astype(compute_dtype), w5, b5, True)
    d3 = linear(d2.astype(compute_dtype), w6, b6, True)
    xb = linear(d3.astype(compute_dtype), wx, bx, False)
    emit(o_xb, xb)


def _pad2d(a, rows, cols):
    r, c = a.shape
    if r == rows and c == cols:
        return a
    return jnp.pad(a, ((0, rows - r), (0, cols - c)))


def _pick_tm(N, n_in_pad, total_pad, dims_pad, weight_bytes, vmem_limit):
    """Largest batch tile (multiple of 8, <=512) whose working set fits VMEM."""
    budget = int(0.75 * vmem_limit) - weight_bytes
    # Per-row f32 bytes: double-buffered x + double-buffered out slab +
    # live intermediates (f32 + compute-dtype copy upper bound).
    per_row = 4 * (2 * n_in_pad + 2 * total_pad) + 8 * sum(dims_pad)
    rows = budget // per_row if budget > 0 else 8
    tm = max(8, min(512, (rows // 8) * 8))
    # Don't over-pad tiny batches.
    tm = min(tm, _round_up(N, 8))
    # Keep >= 2 grid steps when the batch allows (v7x megacore sharding).
    if N >= 16:
        tm = min(tm, _round_up(-(-N // 2), 8))
    return max(8, tm)


def ae_forward(x, params, *, tm=None, compute_dtype=jnp.float32):
    """Fused AE forward. params = list of 8 (W[in,out], b[1,out]).

    Returns (x_bar, enc_h1, enc_h2, enc_h3, z) in float32, matching the
    PyTorch module semantics (weights stored transposed: [in, out]).
    """
    N, n_input = x.shape
    # Layer width chain: [n_input, n_enc_1, n_enc_2, n_enc_3, n_z,
    #                     n_dec_1, n_dec_2, n_dec_3, n_input]
    dims = [params[0][0].shape[0]] + [p[0].shape[1] for p in params]
    assert dims[0] == n_input and dims[-1] == n_input
    for i, (w, b) in enumerate(params):
        assert w.shape == (dims[i], dims[i + 1]) and b.shape == (1, dims[i + 1])
    dims_pad = [_round_up(d, 128) for d in dims]
    n_in_pad = dims_pad[0]

    # ---- pad params to full (8,128)-tileable shapes; weights at rest in the
    #      compute dtype (bf16 halves weight DMA / VMEM on v5e/v6e/v7x) ------
    padded_params = []
    for i, (w, b) in enumerate(params):
        wp = _pad2d(w, dims_pad[i], dims_pad[i + 1]).astype(compute_dtype)
        bp = _pad2d(b, 1, dims_pad[i + 1]).astype(jnp.float32)
        padded_params.append((wp, bp))
    weight_bytes = sum(wp.size * wp.dtype.itemsize + bp.size * bp.dtype.itemsize
                       for wp, bp in padded_params)

    # ---- lane-dense output slab layout: [x_bar | h1 | h2 | h3 | z], each
    #      section padded to a multiple of 128 columns ----------------------
    sec_orig = [dims[-1], dims[1], dims[2], dims[3], dims[4]]
    sec_pad = [dims_pad[-1], dims_pad[1], dims_pad[2], dims_pad[3], dims_pad[4]]
    offs, off = [], 0
    for wpad in sec_pad:
        offs.append(off)
        off += wpad
    total_pad = off

    # ---- VMEM budgeting & batch tile --------------------------------------
    buffered_ok = _supports_buffered_blockspec()
    vmem_limit = min(int(_vmem_capacity_bytes() * 0.8), 100 << 20)
    eff_weight_bytes = weight_bytes if buffered_ok else 2 * weight_bytes
    if tm is None:
        tm = _pick_tm(N, n_in_pad, total_pad, dims_pad, eff_weight_bytes,
                      vmem_limit)
    tm = max(8, _round_up(min(tm, _round_up(N, 8)), 8))
    N_pad = _round_up(N, tm)

    x_pad = _pad2d(x, N_pad, n_in_pad)

    # ---- specs --------------------------------------------------------------
    wkw = {"pipeline_mode": pl.Buffered(1)} if buffered_ok else {}
    in_specs = [pl.BlockSpec((tm, n_in_pad), lambda i: (i, 0))]
    for (wp, bp) in padded_params:
        in_specs.append(pl.BlockSpec(wp.shape, lambda i: (0, 0), **wkw))
        in_specs.append(pl.BlockSpec(bp.shape, lambda i: (0, 0), **wkw))

    flops = 2 * N_pad * sum(dims_pad[i] * dims_pad[i + 1] for i in range(8))
    bytes_accessed = (N_pad * n_in_pad * x_pad.dtype.itemsize
                      + N_pad * total_pad * 4 + weight_bytes)
    cost = pl.CostEstimate(flops=int(flops), transcendentals=0,
                           bytes_accessed=int(bytes_accessed))

    kern = functools.partial(ae_kernel, compute_dtype=compute_dtype,
                             offs=tuple(offs))

    slab = pl.pallas_call(
        kern,
        out_shape=jax.ShapeDtypeStruct((N_pad, total_pad), jnp.float32),
        grid_spec=pltpu.PrefetchScalarGridSpec(
            num_scalar_prefetch=0,
            grid=(N_pad // tm,),
            in_specs=in_specs,
            out_specs=pl.BlockSpec((tm, total_pad), lambda i: (i, 0)),
        ),
        compiler_params=pltpu.CompilerParams(
            dimension_semantics=("parallel",),
            vmem_limit_bytes=int(vmem_limit)),
        cost_estimate=cost,
    )(x_pad, *[a for wb in padded_params for a in wb])

    xb = slab[:N, offs[0]:offs[0] + sec_orig[0]]
    h1 = slab[:N, offs[1]:offs[1] + sec_orig[1]]
    h2 = slab[:N, offs[2]:offs[2] + sec_orig[2]]
    h3 = slab[:N, offs[3]:offs[3] + sec_orig[3]]
    z = slab[:N, offs[4]:offs[4] + sec_orig[4]]
    return xb, h1, h2, h3, z


def init_linear(key, fan_in, fan_out, dtype=jnp.float32):
    """Mimics torch.nn.Linear default init: U(-1/sqrt(fan_in), 1/sqrt(fan_in))."""
    kw, kb = jax.random.split(key)
    bound = 1.0 / (fan_in ** 0.5)
    # Stored as [in, out] (transpose of PyTorch's [out, in]).
    w = jax.random.uniform(kw, (fan_in, fan_out), dtype, -bound, bound)
    b = jax.random.uniform(kb, (1, fan_out), dtype, -bound, bound)
    return w, b


def reference_forward(x, params):
    """Plain-JAX reference matching the PyTorch module semantics."""
    (w1, b1), (w2, b2), (w3, b3), (wz, bz), (w4, b4), (w5, b5), (w6, b6), (wx, bx) = params
    h1 = jax.nn.relu(x @ w1 + b1)
    h2 = jax.nn.relu(h1 @ w2 + b2)
    h3 = jax.nn.relu(h2 @ w3 + b3)
    z = h3 @ wz + bz
    d1 = jax.nn.relu(z @ w4 + b4)
    d2 = jax.nn.relu(d1 @ w5 + b5)
    d3 = jax.nn.relu(d2 @ w6 + b6)
    xb = d3 @ wx + bx
    return xb, h1, h2, h3, z
    # TODO(synk): the PyTorch module also stashes `self.layer_shapes` (Python-side
    # bookkeeping only); it has no tensor output so it is not reproduced.


if __name__ == "__main__":
    # Small, module-consistent sizes.
    n_input, n_enc_1, n_enc_2, n_enc_3, n_z = 16, 32, 32, 64, 8
    n_dec_1, n_dec_2, n_dec_3 = 64, 32, 32
    batch = 30   # not a multiple of 8 -> exercises padded last tile

    key = jax.random.PRNGKey(0)
    keys = jax.random.split(key, 9)
    x = jax.random.normal(keys[0], (batch, n_input), jnp.float32)

    layer_dims = [
        (n_input, n_enc_1), (n_enc_1, n_enc_2), (n_enc_2, n_enc_3), (n_enc_3, n_z),
        (n_z, n_dec_1), (n_dec_1, n_dec_2), (n_dec_2, n_dec_3), (n_dec_3, n_input),
    ]
    params = [init_linear(keys[i + 1], din, dout)
              for i, (din, dout) in enumerate(layer_dims)]

    refs = reference_forward(x, params)

    # f32 path (exact-ish).
    outs = jax.block_until_ready(ae_forward(x, params))
    for o, r in zip(outs, refs):
        assert o.shape == r.shape
        assert jnp.max(jnp.abs(o - r)) < 1e-4

    # bf16 MXU path (weights stored bf16 at rest); looser tolerance.
    outs_bf16 = jax.block_until_ready(
        ae_forward(x, params, compute_dtype=jnp.bfloat16))
    for o, r in zip(outs_bf16, refs):
        assert o.shape == r.shape
        assert jnp.max(jnp.abs(o - r)) < 2e-1

    print("KERNEL_OK")
</pallas_src>

<mosaic_0001>
module attributes {stable_mosaic.version = 11 : i64} {
  func.func @ae_kernel(%arg0: i32, %arg1: memref<16x128xf32, #tpu.memory_space<vmem>>, %arg2: memref<128x128xf32, #tpu.memory_space<vmem>>, %arg3: memref<1x128xf32, #tpu.memory_space<vmem>>, %arg4: memref<128x128xf32, #tpu.memory_space<vmem>>, %arg5: memref<1x128xf32, #tpu.memory_space<vmem>>, %arg6: memref<128x128xf32, #tpu.memory_space<vmem>>, %arg7: memref<1x128xf32, #tpu.memory_space<vmem>>, %arg8: memref<128x128xf32, #tpu.memory_space<vmem>>, %arg9: memref<1x128xf32, #tpu.memory_space<vmem>>, %arg10: memref<128x128xf32, #tpu.memory_space<vmem>>, %arg11: memref<1x128xf32, #tpu.memory_space<vmem>>, %arg12: memref<128x128xf32, #tpu.memory_space<vmem>>, %arg13: memref<1x128xf32, #tpu.memory_space<vmem>>, %arg14: memref<128x128xf32, #tpu.memory_space<vmem>>, %arg15: memref<1x128xf32, #tpu.memory_space<vmem>>, %arg16: memref<128x128xf32, #tpu.memory_space<vmem>>, %arg17: memref<1x128xf32, #tpu.memory_space<vmem>>, %arg18: memref<16x640xf32, #tpu.memory_space<vmem>>) attributes {dimension_semantics = [#tpu.dimension_semantics<parallel>], iteration_bounds = array<i64: 2>, scalar_prefetch = 0 : i64, scratch_operands = 0 : i64, tpu.core_type = #tpu.core_type<tc>, window_params = [{transform_indices = @transform_0, window_bounds = array<i64: 16, 128>}, {pipeline_mode = #tpu.pipeline_mode<synchronous>, transform_indices = @transform_1, window_bounds = array<i64: 128, 128>}, {pipeline_mode = #tpu.pipeline_mode<synchronous>, transform_indices = @transform_2, window_bounds = array<i64: 1, 128>}, {pipeline_mode = #tpu.pipeline_mode<synchronous>, transform_indices = @transform_3, window_bounds = array<i64: 128, 128>}, {pipeline_mode = #tpu.pipeline_mode<synchronous>, transform_indices = @transform_4, window_bounds = array<i64: 1, 128>}, {pipeline_mode = #tpu.pipeline_mode<synchronous>, transform_indices = @transform_5, window_bounds = array<i64: 128, 128>}, {pipeline_mode = #tpu.pipeline_mode<synchronous>, transform_indices = @transform_6, window_bounds = array<i64: 1, 128>}, {pipeline_mode = #tpu.pipeline_mode<synchronous>, transform_indices = @transform_7, window_bounds = array<i64: 128, 128>}, {pipeline_mode = #tpu.pipeline_mode<synchronous>, transform_indices = @transform_8, window_bounds = array<i64: 1, 128>}, {pipeline_mode = #tpu.pipeline_mode<synchronous>, transform_indices = @transform_9, window_bounds = array<i64: 128, 128>}, {pipeline_mode = #tpu.pipeline_mode<synchronous>, transform_indices = @transform_10, window_bounds = array<i64: 1, 128>}, {pipeline_mode = #tpu.pipeline_mode<synchronous>, transform_indices = @transform_11, window_bounds = array<i64: 128, 128>}, {pipeline_mode = #tpu.pipeline_mode<synchronous>, transform_indices = @transform_12, window_bounds = array<i64: 1, 128>}, {pipeline_mode = #tpu.pipeline_mode<synchronous>, transform_indices = @transform_13, window_bounds = array<i64: 128, 128>}, {pipeline_mode = #tpu.pipeline_mode<synchronous>, transform_indices = @transform_14, window_bounds = array<i64: 1, 128>}, {pipeline_mode = #tpu.pipeline_mode<synchronous>, transform_indices = @transform_15, window_bounds = array<i64: 128, 128>}, {pipeline_mode = #tpu.pipeline_mode<synchronous>, transform_indices = @transform_16, window_bounds = array<i64: 1, 128>}, {transform_indices = @transform_17, window_bounds = array<i64: 16, 640>}]} {
    %c0 = arith.constant 0 : index
    %c0_0 = arith.constant 0 : index
    %0 = vector.load %arg1[%c0, %c0_0] : memref<16x128xf32, #tpu.memory_space<vmem>>, vector<16x128xf32>
    %c0_1 = arith.constant 0 : index
    %c0_2 = arith.constant 0 : index
    %1 = vector.load %arg2[%c0_1, %c0_2] : memref<128x128xf32, #tpu.memory_space<vmem>>, vector<128x128xf32>
    %cst = arith.constant dense<0.000000e+00> : vector<16x128xf32>
    %2 = tpu.matmul %0, %1, %cst {dimension_numbers = #tpu.dot_dimension_numbers<[1], [0], [0], [1], [0, 0, 1, 1], [], []>} : vector<16x128xf32>, vector<128x128xf32>, vector<16x128xf32> -> vector<16x128xf32>
    %c0_3 = arith.constant 0 : index
    %c0_4 = arith.constant 0 : index
    %3 = vector.load %arg3[%c0_3, %c0_4] : memref<1x128xf32, #tpu.memory_space<vmem>>, vector<1x128xf32>
    %4 = vector.broadcast %3 : vector<1x128xf32> to vector<16x128xf32>
    %5 = arith.addf %2, %4 : vector<16x128xf32>
    %cst_5 = arith.constant 0.000000e+00 : f32
    %6 = vector.broadcast %cst_5 : f32 to vector<16x128xf32>
    %7 = arith.maximumf %5, %6 : vector<16x128xf32>
    %c0_6 = arith.constant 0 : index
    %c128 = arith.constant 128 : index
    %8 = vector.load %arg18[%c0_6, %c128] : memref<16x640xf32, #tpu.memory_space<vmem>>, vector<16x128xf32>
    tpu.vector_store %arg18[%c0_6, %c128], %7 {strides = array<i32>} : memref<16x640xf32, #tpu.memory_space<vmem>>, vector<16x128xf32>,
    %c0_7 = arith.constant 0 : index
    %c0_8 = arith.constant 0 : index
    %9 = vector.load %arg4[%c0_7, %c0_8] : memref<128x128xf32, #tpu.memory_space<vmem>>, vector<128x128xf32>
    %cst_9 = arith.constant dense<0.000000e+00> : vector<16x128xf32>
    %10 = tpu.matmul %7, %9, %cst_9 {dimension_numbers = #tpu.dot_dimension_numbers<[1], [0], [0], [1], [0, 0, 1, 1], [], []>} : vector<16x128xf32>, vector<128x128xf32>, vector<16x128xf32> -> vector<16x128xf32>
    %c0_10 = arith.constant 0 : index
    %c0_11 = arith.constant 0 : index
    %11 = vector.load %arg5[%c0_10, %c0_11] : memref<1x128xf32, #tpu.memory_space<vmem>>, vector<1x128xf32>
    %12 = vector.broadcast %11 : vector<1x128xf32> to vector<16x128xf32>
    %13 = arith.addf %10, %12 : vector<16x128xf32>
    %cst_12 = arith.constant 0.000000e+00 : f32
    %14 = vector.broadcast %cst_12 : f32 to vector<16x128xf32>
    %15 = arith.maximumf %13, %14 : vector<16x128xf32>
    %c0_13 = arith.constant 0 : index
    %c256 = arith.constant 256 : index
    %16 = vector.load %arg18[%c0_13, %c256] : memref<16x640xf32, #tpu.memory_space<vmem>>, vector<16x128xf32>
    tpu.vector_store %arg18[%c0_13, %c256], %15 {strides = array<i32>} : memref<16x640xf32, #tpu.memory_space<vmem>>, vector<16x128xf32>,
    %c0_14 = arith.constant 0 : index
    %c0_15 = arith.constant 0 : index
    %17 = vector.load %arg6[%c0_14, %c0_15] : memref<128x128xf32, #tpu.memory_space<vmem>>, vector<128x128xf32>
    %cst_16 = arith.constant dense<0.000000e+00> : vector<16x128xf32>
    %18 = tpu.matmul %15, %17, %cst_16 {dimension_numbers = #tpu.dot_dimension_numbers<[1], [0], [0], [1], [0, 0, 1, 1], [], []>} : vector<16x128xf32>, vector<128x128xf32>, vector<16x128xf32> -> vector<16x128xf32>
    %c0_17 = arith.constant 0 : index
    %c0_18 = arith.constant 0 : index
    %19 = vector.load %arg7[%c0_17, %c0_18] : memref<1x128xf32, #tpu.memory_space<vmem>>, vector<1x128xf32>
    %20 = vector.broadcast %19 : vector<1x128xf32> to vector<16x128xf32>
    %21 = arith.addf %18, %20 : vector<16x128xf32>
    %cst_19 = arith.constant 0.000000e+00 : f32
    %22 = vector.broadcast %cst_19 : f32 to vector<16x128xf32>
    %23 = arith.maximumf %21, %22 : vector<16x128xf32>
    %c0_20 = arith.constant 0 : index
    %c384 = arith.constant 384 : index
    %24 = vector.load %arg18[%c0_20, %c384] : memref<16x640xf32, #tpu.memory_space<vmem>>, vector<16x128xf32>
    tpu.vector_store %arg18[%c0_20, %c384], %23 {strides = array<i32>} : memref<16x640xf32, #tpu.memory_space<vmem>>, vector<16x128xf32>,
    %c0_21 = arith.constant 0 : index
    %c0_22 = arith.constant 0 : index
    %25 = vector.load %arg8[%c0_21, %c0_22] : memref<128x128xf32, #tpu.memory_space<vmem>>, vector<128x128xf32>
    %cst_23 = arith.constant dense<0.000000e+00> : vector<16x128xf32>
    %26 = tpu.matmul %23, %25, %cst_23 {dimension_numbers = #tpu.dot_dimension_numbers<[1], [0], [0], [1], [0, 0, 1, 1], [], []>} : vector<16x128xf32>, vector<128x128xf32>, vector<16x128xf32> -> vector<16x128xf32>
    %c0_24 = arith.constant 0 : index
    %c0_25 = arith.constant 0 : index
    %27 = vector.load %arg9[%c0_24, %c0_25] : memref<1x128xf32, #tpu.memory_space<vmem>>, vector<1x128xf32>
    %28 = vector.broadcast %27 : vector<1x128xf32> to vector<16x128xf32>
    %29 = arith.addf %26, %28 : vector<16x128xf32>
    %c0_26 = arith.constant 0 : index
    %c512 = arith.constant 512 : index
    %30 = vector.load %arg18[%c0_26, %c512] : memref<16x640xf32, #tpu.memory_space<vmem>>, vector<16x128xf32>
    tpu.vector_store %arg18[%c0_26, %c512], %29 {strides = array<i32>} : memref<16x640xf32, #tpu.memory_space<vmem>>, vector<16x128xf32>,
    %c0_27 = arith.constant 0 : index
    %c0_28 = arith.constant 0 : index
    %31 = vector.load %arg10[%c0_27, %c0_28] : memref<128x128xf32, #tpu.memory_space<vmem>>, vector<128x128xf32>
    %cst_29 = arith.constant dense<0.000000e+00> : vector<16x128xf32>
    %32 = tpu.matmul %29, %31, %cst_29 {dimension_numbers = #tpu.dot_dimension_numbers<[1], [0], [0], [1], [0, 0, 1, 1], [], []>} : vector<16x128xf32>, vector<128x128xf32>, vector<16x128xf32> -> vector<16x128xf32>
    %c0_30 = arith.constant 0 : index
    %c0_31 = arith.constant 0 : index
    %33 = vector.load %arg11[%c0_30, %c0_31] : memref<1x128xf32, #tpu.memory_space<vmem>>, vector<1x128xf32>
    %34 = vector.broadcast %33 : vector<1x128xf32> to vector<16x128xf32>
    %35 = arith.addf %32, %34 : vector<16x128xf32>
    %cst_32 = arith.constant 0.000000e+00 : f32
    %36 = vector.broadcast %cst_32 : f32 to vector<16x128xf32>
    %37 = arith.maximumf %35, %36 : vector<16x128xf32>
    %c0_33 = arith.constant 0 : index
    %c0_34 = arith.constant 0 : index
    %38 = vector.load %arg12[%c0_33, %c0_34] : memref<128x128xf32, #tpu.memory_space<vmem>>, vector<128x128xf32>
    %cst_35 = arith.constant dense<0.000000e+00> : vector<16x128xf32>
    %39 = tpu.matmul %37, %38, %cst_35 {dimension_numbers = #tpu.dot_dimension_numbers<[1], [0], [0], [1], [0, 0, 1, 1], [], []>} : vector<16x128xf32>, vector<128x128xf32>, vector<16x128xf32> -> vector<16x128xf32>
    %c0_36 = arith.constant 0 : index
    %c0_37 = arith.constant 0 : index
    %40 = vector.load %arg13[%c0_36, %c0_37] : memref<1x128xf32, #tpu.memory_space<vmem>>, vector<1x128xf32>
    %41 = vector.broadcast %40 : vector<1x128xf32> to vector<16x128xf32>
    %42 = arith.addf %39, %41 : vector<16x128xf32>
    %cst_38 = arith.constant 0.000000e+00 : f32
    %43 = vector.broadcast %cst_38 : f32 to vector<16x128xf32>
    %44 = arith.maximumf %42, %43 : vector<16x128xf32>
    %c0_39 = arith.constant 0 : index
    %c0_40 = arith.constant 0 : index
    %45 = vector.load %arg14[%c0_39, %c0_40] : memref<128x128xf32, #tpu.memory_space<vmem>>, vector<128x128xf32>
    %cst_41 = arith.constant dense<0.000000e+00> : vector<16x128xf32>
    %46 = tpu.matmul %44, %45, %cst_41 {dimension_numbers = #tpu.dot_dimension_numbers<[1], [0], [0], [1], [0, 0, 1, 1], [], []>} : vector<16x128xf32>, vector<128x128xf32>, vector<16x128xf32> -> vector<16x128xf32>
    %c0_42 = arith.constant 0 : index
    %c0_43 = arith.constant 0 : index
    %47 = vector.load %arg15[%c0_42, %c0_43] : memref<1x128xf32, #tpu.memory_space<vmem>>, vector<1x128xf32>
    %48 = vector.broadcast %47 : vector<1x128xf32> to vector<16x128xf32>
    %49 = arith.addf %46, %48 : vector<16x128xf32>
    %cst_44 = arith.constant 0.000000e+00 : f32
    %50 = vector.broadcast %cst_44 : f32 to vector<16x128xf32>
    %51 = arith.maximumf %49, %50 : vector<16x128xf32>
    %c0_45 = arith.constant 0 : index
    %c0_46 = arith.constant 0 : index
    %52 = vector.load %arg16[%c0_45, %c0_46] : memref<128x128xf32, #tpu.memory_space<vmem>>, vector<128x128xf32>
    %cst_47 = arith.constant dense<0.000000e+00> : vector<16x128xf32>
    %53 = tpu.matmul %51, %52, %cst_47 {dimension_numbers = #tpu.dot_dimension_numbers<[1], [0], [0], [1], [0, 0, 1, 1], [], []>} : vector<16x128xf32>, vector<128x128xf32>, vector<16x128xf32> -> vector<16x128xf32>
    %c0_48 = arith.constant 0 : index
    %c0_49 = arith.constant 0 : index
    %54 = vector.load %arg17[%c0_48, %c0_49] : memref<1x128xf32, #tpu.memory_space<vmem>>, vector<1x128xf32>
    %55 = vector.broadcast %54 : vector<1x128xf32> to vector<16x128xf32>
    %56 = arith.addf %53, %55 : vector<16x128xf32>
    %c0_50 = arith.constant 0 : index
    %c0_51 = arith.constant 0 : index
    %57 = vector.load %arg18[%c0_50, %c0_51] : memref<16x640xf32, #tpu.memory_space<vmem>>, vector<16x128xf32>
    tpu.vector_store %arg18[%c0_50, %c0_51], %56 {strides = array<i32>} : memref<16x640xf32, #tpu.memory_space<vmem>>, vector<16x128xf32>,
    return
  }
  func.func @transform_0(%arg0: i32) -> (i32, i32) {
    %c0_i32 = arith.constant 0 : i32
    %c0_i32_0 = arith.constant 0 : i32
    return %arg0, %c0_i32 : i32, i32
  }
  func.func @transform_1(%arg0: i32) -> (i32, i32) {
    %c0_i32 = arith.constant 0 : i32
    %c0_i32_0 = arith.constant 0 : i32
    %c0_i32_1 = arith.constant 0 : i32
    return %c0_i32, %c0_i32_0 : i32, i32
  }
  func.func @transform_2(%arg0: i32) -> (i32, i32) {
    %c0_i32 = arith.constant 0 : i32
    %c0_i32_0 = arith.constant 0 : i32
    %c0_i32_1 = arith.constant 0 : i32
    return %c0_i32, %c0_i32_0 : i32, i32
  }
  func.func @transform_3(%arg0: i32) -> (i32, i32) {
    %c0_i32 = arith.constant 0 : i32
    %c0_i32_0 = arith.constant 0 : i32
    %c0_i32_1 = arith.constant 0 : i32
    return %c0_i32, %c0_i32_0 : i32, i32
  }
  func.func @transform_4(%arg0: i32) -> (i32, i32) {
    %c0_i32 = arith.constant 0 : i32
    %c0_i32_0 = arith.constant 0 : i32
    %c0_i32_1 = arith.constant 0 : i32
    return %c0_i32, %c0_i32_0 : i32, i32
  }
  func.func @transform_5(%arg0: i32) -> (i32, i32) {
    %c0_i32 = arith.constant 0 : i32
    %c0_i32_0 = arith.constant 0 : i32
    %c0_i32_1 = arith.constant 0 : i32
    return %c0_i32, %c0_i32_0 : i32, i32
  }
  func.func @transform_6(%arg0: i32) -> (i32, i32) {
    %c0_i32 = arith.constant 0 : i32
    %c0_i32_0 = arith.constant 0 : i32
    %c0_i32_1 = arith.constant 0 : i32
    return %c0_i32, %c0_i32_0 : i32, i32
  }
  func.func @transform_7(%arg0: i32) -> (i32, i32) {
    %c0_i32 = arith.constant 0 : i32
    %c0_i32_0 = arith.constant 0 : i32
    %c0_i32_1 = arith.constant 0 : i32
    return %c0_i32, %c0_i32_0 : i32, i32
  }
  func.func @transform_8(%arg0: i32) -> (i32, i32) {
    %c0_i32 = arith.constant 0 : i32
    %c0_i32_0 = arith.constant 0 : i32
    %c0_i32_1 = arith.constant 0 : i32
    return %c0_i32, %c0_i32_0 : i32, i32
  }
  func.func @transform_9(%arg0: i32) -> (i32, i32) {
    %c0_i32 = arith.constant 0 : i32
    %c0_i32_0 = arith.constant 0 : i32
    %c0_i32_1 = arith.constant 0 : i32
    return %c0_i32, %c0_i32_0 : i32, i32
  }
  func.func @transform_10(%arg0: i32) -> (i32, i32) {
    %c0_i32 = arith.constant 0 : i32
    %c0_i32_0 = arith.constant 0 : i32
    %c0_i32_1 = arith.constant 0 : i32
    return %c0_i32, %c0_i32_0 : i32, i32
  }
  func.func @transform_11(%arg0: i32) -> (i32, i32) {
    %c0_i32 = arith.constant 0 : i32
    %c0_i32_0 = arith.constant 0 : i32
    %c0_i32_1 = arith.constant 0 : i32
    return %c0_i32, %c0_i32_0 : i32, i32
  }
  func.func @transform_12(%arg0: i32) -> (i32, i32) {
    %c0_i32 = arith.constant 0 : i32
    %c0_i32_0 = arith.constant 0 : i32
    %c0_i32_1 = arith.constant 0 : i32
    return %c0_i32, %c0_i32_0 : i32, i32
  }
  func.func @transform_13(%arg0: i32) -> (i32, i32) {
    %c0_i32 = arith.constant 0 : i32
    %c0_i32_0 = arith.constant 0 : i32
    %c0_i32_1 = arith.constant 0 : i32
    return %c0_i32, %c0_i32_0 : i32, i32
  }
  func.func @transform_14(%arg0: i32) -> (i32, i32) {
    %c0_i32 = arith.constant 0 : i32
    %c0_i32_0 = arith.constant 0 : i32
    %c0_i32_1 = arith.constant 0 : i32
    return %c0_i32, %c0_i32_0 : i32, i32
  }
  func.func @transform_15(%arg0: i32) -> (i32, i32) {
    %c0_i32 = arith.constant 0 : i32
    %c0_i32_0 = arith.constant 0 : i32
    %c0_i32_1 = arith.constant 0 : i32
    return %c0_i32, %c0_i32_0 : i32, i32
  }
  func.func @transform_16(%arg0: i32) -> (i32, i32) {
    %c0_i32 = arith.constant 0 : i32
    %c0_i32_0 = arith.constant 0 : i32
    %c0_i32_1 = arith.constant 0 : i32
    return %c0_i32, %c0_i32_0 : i32, i32
  }
  func.func @transform_17(%arg0: i32) -> (i32, i32) {
    %c0_i32 = arith.constant 0 : i32
    %c0_i32_0 = arith.constant 0 : i32
    return %arg0, %c0_i32 : i32, i32
  }
}

</mosaic_0001>

<llo_original>
// kernel: tpu_custom_call.1
$region0: #{tpu_custom_call.1}
  #allocation0 [shape = 'u32[]', space=smem, size = 0x4, offset = 0x4, fixed_abs, tag = 'smem constant byte address 0x4 - core index']
  #allocation1 [shape = 'u32[144,128]{1,0:T(1,128)}', space=vmem, size = 0x12000, scoped, tag = 'internal scratch']
  %s0 = inlined_call_operand.hbm [shape: f32[32,128], index: 0, kind: input, shape index: {}]
  %s1 = inlined_call_operand.hbm [shape: f32[128,128], index: 1, kind: input, shape index: {}]
  %s2 = inlined_call_operand.vmem [shape: f32[1,128], index: 2, kind: input, shape index: {}]
  %s3 = inlined_call_operand.hbm [shape: f32[128,128], index: 3, kind: input, shape index: {}]
  %s4 = inlined_call_operand.vmem [shape: f32[1,128], index: 4, kind: input, shape index: {}]
  %s5 = inlined_call_operand.hbm [shape: f32[128,128], index: 5, kind: input, shape index: {}]
  %s6 = inlined_call_operand.vmem [shape: f32[1,128], index: 6, kind: input, shape index: {}]
  %s7 = inlined_call_operand.hbm [shape: f32[128,128], index: 7, kind: input, shape index: {}]
  %s8 = inlined_call_operand.vmem [shape: f32[1,128], index: 8, kind: input, shape index: {}]
  %s9 = inlined_call_operand.hbm [shape: f32[128,128], index: 9, kind: input, shape index: {}]
  %s10 = inlined_call_operand.vmem [shape: f32[1,128], index: 10, kind: input, shape index: {}]
  %s11 = inlined_call_operand.hbm [shape: f32[128,128], index: 11, kind: input, shape index: {}]
  %s12 = inlined_call_operand.vmem [shape: f32[1,128], index: 12, kind: input, shape index: {}]
  %s13 = inlined_call_operand.hbm [shape: f32[128,128], index: 13, kind: input, shape index: {}]
  %s14 = inlined_call_operand.vmem [shape: f32[1,128], index: 14, kind: input, shape index: {}]
  %s15 = inlined_call_operand.hbm [shape: f32[128,128], index: 15, kind: input, shape index: {}]
  %s16 = inlined_call_operand.vmem [shape: f32[1,128], index: 16, kind: input, shape index: {}]
  %s17 = inlined_call_operand.hbm [shape: f32[32,640], index: 17, kind: output, shape index: {}]
  %s18 = sld [smem:[#allocation0]]
  $region137: #{tpu_custom_call.1} parent=0
    _
  %s20 = ssub.s32 1, %s18
  %s21 = scalar_select 0, %s20, %s18
  $region1: #{tpu_custom_call.1} parent=0
    #allocation2 [shape = 'u8[16384]{0}', space=vmem, size = 0x4000, scoped, tag = 'input window, operand 0']
    #allocation3 [shape = 's32[2]{0}', space=sflag, size = 0x8, scoped, tag = 'scoped memory for tpu_custom_call.1']
    #allocation4 [shape = 's32[2]{0}', space=sflag, size = 0x8, scoped, tag = 'scoped memory for tpu_custom_call.1']
    #allocation5 [shape = 'u8[65536]{0}', space=vmem, size = 0x10000, scoped, tag = 'input window, operand 1, single buffered']
    #allocation6 [shape = 's32[1]{0}', space=sflag, size = 0x4, scoped, tag = 'scoped memory for tpu_custom_call.1']
    #allocation7 [shape = 'u8[65536]{0}', space=vmem, size = 0x10000, scoped, tag = 'input window, operand 3, single buffered']
    #allocation8 [shape = 'u8[65536]{0}', space=vmem, size = 0x10000, scoped, tag = 'input window, operand 5, single buffered']
    #allocation9 [shape = 's32[1]{0}', space=sflag, size = 0x4, scoped, tag = 'scoped memory for tpu_custom_call.1']
    #allocation10 [shape = 'u8[65536]{0}', space=vmem, size = 0x10000, scoped, tag = 'input window, operand 7, single buffered']
    #allocation11 [shape = 'u8[65536]{0}', space=vmem, size = 0x10000, scoped, tag = 'input window, operand 9, single buffered']
    #allocation12 [shape = 's32[1]{0}', space=sflag, size = 0x4, scoped, tag = 'scoped memory for tpu_custom_call.1']
    #allocation13 [shape = 'u8[65536]{0}', space=vmem, size = 0x10000, scoped, tag = 'input window, operand 11, single buffered']
    #allocation14 [shape = 'u8[65536]{0}', space=vmem, size = 0x10000, scoped, tag = 'input window, operand 13, single buffered']
    #allocation15 [shape = 's32[1]{0}', space=sflag, size = 0x4, scoped, tag = 'scoped memory for tpu_custom_call.1']
    #allocation16 [shape = 'u8[65536]{0}', space=vmem, size = 0x10000, scoped, tag = 'input window, operand 15, single buffered']
    #allocation17 [shape = 'u8[81920]{0}', space=vmem, size = 0x14000, scoped, tag = 'output window, operand 0']
    %22 = vsyncpa [#allocation3], 0
    %s23 = scalar_lea.sflag [#allocation3], 1
    %24 = vsyncpa %s23, 0
    %25 = vsyncpa [#allocation6], 0
    %26 = vsyncpa [#allocation9], 0
    %27 = vsyncpa [#allocation12], 0
    %28 = vsyncpa [#allocation15], 0
    %29 = vsyncpa [#allocation4], 0
    %s30 = scalar_lea.sflag [#allocation4], 1
    %31 = vsyncpa %s30, 0
    loop: start=0, step=1, limit=4
    $region2: #{tpu_custom_call.1} parent=1 // loop_pre_header
      _
    $region3: #{tpu_custom_call.1} parent=1 // loop_header
      %s33 = sphi 0, %s37
      %p34 = scmp.ge.s32.totalorder %s33, 4
      %s43 = sphi 0, %s45
      %s46 = sphi 0, %s43
      %s47 = sphi 0, %s46
      %s63 = sphi 0, %s47
      %s67 = sphi 0, %s67
      %s69 = sphi 0, %s67
      %s70 = sphi 0, %s69
      %s84 = sphi 0, %s70
      %s88 = sphi 0, %s88
      %s90 = sphi 0, %s88
      %s91 = sphi 0, %s90
      %s105 = sphi 0, %s91
      %s109 = sphi 0, %s109
      %s111 = sphi 0, %s109
      %s112 = sphi 0, %s111
      %s126 = sphi 0, %s112
      %s130 = sphi 0, %s130
      %s132 = sphi 0, %s130
      %s133 = sphi 0, %s132
      %s147 = sphi 0, %s133
      %s151 = sphi 0, %s151
      %s153 = sphi 0, %s151
      %s154 = sphi 0, %s153
      %s168 = sphi 0, %s154
      %s172 = sphi 0, %s172
      %s174 = sphi 0, %s172
      %s175 = sphi 0, %s174
      %s189 = sphi 0, %s175
      %s193 = sphi 0, %s193
      %s195 = sphi 0, %s193
      %s196 = sphi 0, %s195
      %s210 = sphi 0, %s196
      %s214 = sphi 0, %s214
      %s216 = sphi 0, %s214
      %s217 = sphi 0, %s216
      %s231 = sphi 0, %s217
      %s235 = sphi 0, %s235
      %s237 = sphi 0, %s235
      %s238 = sphi 0, %s237
      %s252 = sphi 0, %s238
      %s256 = sphi 0, %s256
      %s258 = sphi 0, %s256
      %s259 = sphi 0, %s258
      %s273 = sphi 0, %s259
      %s277 = sphi 0, %s277
      %s279 = sphi 0, %s277
      %s280 = sphi 0, %s279
      %s294 = sphi 0, %s280
      %s298 = sphi 0, %s298
      %s300 = sphi 0, %s298
      %s301 = sphi 0, %s300
      %s315 = sphi 0, %s301
      %s319 = sphi 0, %s319
      %s321 = sphi 0, %s319
      %s322 = sphi 0, %s321
      %s336 = sphi 0, %s322
      %s340 = sphi 0, %s340
      %s342 = sphi 0, %s340
      %s343 = sphi 0, %s342
      %s357 = sphi 0, %s343
      %s361 = sphi 0, %s361
      %s363 = sphi 0, %s361
      %s364 = sphi 0, %s363
      %s378 = sphi 0, %s364
      %s382 = sphi 0, %s382
      %s384 = sphi 0, %s382
      %s385 = sphi 0, %s384
      %s399 = sphi 0, %s385
      %s405 = sphi 0, %s407
      %s408 = sphi 0, %s405
      %s409 = sphi 0, %s408
      %s425 = sphi 0, %s409
    $region4: #{tpu_custom_call.1} parent=1 // loop_header_branch
      %36 = sbr.rel (%p34) target = $region8
    $region5: #{tpu_custom_call.1} parent=1 // loop_body
      %s38 = ssub.s32 %s33, 1
      %s39 = ssub.s32 %s33, 2
      %s40 = sadd.s32 %s33, 1
      %s41 = ssub.s32 %s33, %s40
      %p42 = scmp.eq.s32.totalorder %s41, 0
      %s44 = sadd.s32 %s43, 1
      %s45 = scalar_select %p42, %s43, %s44
      %p48 = pneg %p42
      %p49 = scmp.eq.s32.totalorder %s33, 1
      %p50 = por %p48, %p49
      %p51 = scmp.ne.s32.totalorder %s43, %s46
      %p52 = scmp.eq.s32.totalorder %s33, 0
      %p53 = por %p51, %p52
      %p54 = scmp.ne.s32.totalorder %s43, %s46
      %p55 = scmp.eq.s32.totalorder %s38, 1
      %p56 = por %p54, %p55
      %p57 = scmp.ne.s32.totalorder %s46, %s47
      %p58 = scmp.eq.s32.totalorder %s38, 0
      %p59 = por %p57, %p58
      %p60 = scmp.ne.s32.totalorder %s46, %s47
      %p61 = scmp.eq.s32.totalorder %s39, 1
      %p62 = por %p60, %p61
      %p64 = scmp.ne.s32.totalorder %s47, %s63
      %p65 = scmp.eq.s32.totalorder %s39, 0
      %p66 = por %p64, %p65
      %s68 = sadd.s32 %s67, 1
      %p71 = scmp.eq.s32.totalorder %s33, 1
      %p72 = scmp.ne.s32.totalorder %s67, %s69
      %p73 = scmp.eq.s32.totalorder %s33, 0
      %p74 = por %p72, %p73
      %p75 = scmp.ne.s32.totalorder %s67, %s69
      %p76 = scmp.eq.s32.totalorder %s38, 1
      %p77 = por %p75, %p76
      %p78 = scmp.ne.s32.totalorder %s69, %s70
      %p79 = scmp.eq.s32.totalorder %s38, 0
      %p80 = por %p78, %p79
      %p81 = scmp.ne.s32.totalorder %s69, %s70
      %p82 = scmp.eq.s32.totalorder %s39, 1
      %p83 = por %p81, %p82
      %p85 = scmp.ne.s32.totalorder %s70, %s84
      %p86 = scmp.eq.s32.totalorder %s39, 0
      %p87 = por %p85, %p86
      %s89 = sadd.s32 %s88, 1
      %p92 = scmp.eq.s32.totalorder %s33, 1
      %p93 = scmp.ne.s32.totalorder %s88, %s90
      %p94 = scmp.eq.s32.totalorder %s33, 0
      %p95 = por %p93, %p94
      %p96 = scmp.ne.s32.totalorder %s88, %s90
      %p97 = scmp.eq.s32.totalorder %s38, 1
      %p98 = por %p96, %p97
      %p99 = scmp.ne.s32.totalorder %s90, %s91
      %p100 = scmp.eq.s32.totalorder %s38, 0
      %p101 = por %p99, %p100
      %p102 = scmp.ne.s32.totalorder %s90, %s91
      %p103 = scmp.eq.s32.totalorder %s39, 1
      %p104 = por %p102, %p103
      %p106 = scmp.ne.s32.totalorder %s91, %s105
      %p107 = scmp.eq.s32.totalorder %s39, 0
      %p108 = por %p106, %p107
      %s110 = sadd.s32 %s109, 1
      %p113 = scmp.eq.s32.totalorder %s33, 1
      %p114 = scmp.ne.s32.totalorder %s109, %s111
      %p115 = scmp.eq.s32.totalorder %s33, 0
      %p116 = por %p114, %p115
      %p117 = scmp.ne.s32.totalorder %s109, %s111
      %p118 = scmp.eq.s32.totalorder %s38, 1
      %p119 = por %p117, %p118
      %p120 = scmp.ne.s32.totalorder %s111, %s112
      %p121 = scmp.eq.s32.totalorder %s38, 0
      %p122 = por %p120, %p121
      %p123 = scmp.ne.s32.totalorder %s111, %s112
      %p124 = scmp.eq.s32.totalorder %s39, 1
      %p125 = por %p123, %p124
      %p127 = scmp.ne.s32.totalorder %s112, %s126
      %p128 = scmp.eq.s32.totalorder %s39, 0
      %p129 = por %p127, %p128
      %s131 = sadd.s32 %s130, 1
      %p134 = scmp.eq.s32.totalorder %s33, 1
      %p135 = scmp.ne.s32.totalorder %s130, %s132
      %p136 = scmp.eq.s32.totalorder %s33, 0
      %p137 = por %p135, %p136
      %p138 = scmp.ne.s32.totalorder %s130, %s132
      %p139 = scmp.eq.s32.totalorder %s38, 1
      %p140 = por %p138, %p139
      %p141 = scmp.ne.s32.totalorder %s132, %s133
      %p142 = scmp.eq.s32.totalorder %s38, 0
      %p143 = por %p141, %p142
      %p144 = scmp.ne.s32.totalorder %s132, %s133
      %p145 = scmp.eq.s32.totalorder %s39, 1
      %p146 = por %p144, %p145
      %p148 = scmp.ne.s32.totalorder %s133, %s147
      %p149 = scmp.eq.s32.totalorder %s39, 0
      %p150 = por %p148, %p149
      %s152 = sadd.s32 %s151, 1
      %p155 = scmp.eq.s32.totalorder %s33, 1
      %p156 = scmp.ne.s32.totalorder %s151, %s153
      %p157 = scmp.eq.s32.totalorder %s33, 0
      %p158 = por %p156, %p157
      %p159 = scmp.ne.s32.totalorder %s151, %s153
      %p160 = scmp.eq.s32.totalorder %s38, 1
      %p161 = por %p159, %p160
      %p162 = scmp.ne.s32.totalorder %s153, %s154
      %p163 = scmp.eq.s32.totalorder %s38, 0
      %p164 = por %p162, %p163
      %p165 = scmp.ne.s32.totalorder %s153, %s154
      %p166 = scmp.eq.s32.totalorder %s39, 1
      %p167 = por %p165, %p166
      %p169 = scmp.ne.s32.totalorder %s154, %s168
      %p170 = scmp.eq.s32.totalorder %s39, 0
      %p171 = por %p169, %p170
      %s173 = sadd.s32 %s172, 1
      %p176 = scmp.eq.s32.totalorder %s33, 1
      %p177 = scmp.ne.s32.totalorder %s172, %s174
      %p178 = scmp.eq.s32.totalorder %s33, 0
      %p179 = por %p177, %p178
      %p180 = scmp.ne.s32.totalorder %s172, %s174
      %p181 = scmp.eq.s32.totalorder %s38, 1
      %p182 = por %p180, %p181
      %p183 = scmp.ne.s32.totalorder %s174, %s175
      %p184 = scmp.eq.s32.totalorder %s38, 0
      %p185 = por %p183, %p184
      %p186 = scmp.ne.s32.totalorder %s174, %s175
      %p187 = scmp.eq.s32.totalorder %s39, 1
      %p188 = por %p186, %p187
      %p190 = scmp.ne.s32.totalorder %s175, %s189
      %p191 = scmp.eq.s32.totalorder %s39, 0
      %p192 = por %p190, %p191
      %s194 = sadd.s32 %s193, 1
      %p197 = scmp.eq.s32.totalorder %s33, 1
      %p198 = scmp.ne.s32.totalorder %s193, %s195
      %p199 = scmp.eq.s32.totalorder %s33, 0
      %p200 = por %p198, %p199
      %p201 = scmp.ne.s32.totalorder %s193, %s195
      %p202 = scmp.eq.s32.totalorder %s38, 1
      %p203 = por %p201, %p202
      %p204 = scmp.ne.s32.totalorder %s195, %s196
      %p205 = scmp.eq.s32.totalorder %s38, 0
      %p206 = por %p204, %p205
      %p207 = scmp.ne.s32.totalorder %s195, %s196
      %p208 = scmp.eq.s32.totalorder %s39, 1
      %p209 = por %p207, %p208
      %p211 = scmp.ne.s32.totalorder %s196, %s210
      %p212 = scmp.eq.s32.totalorder %s39, 0
      %p213 = por %p211, %p212
      %s215 = sadd.s32 %s214, 1
      %p218 = scmp.eq.s32.totalorder %s33, 1
      %p219 = scmp.ne.s32.totalorder %s214, %s216
      %p220 = scmp.eq.s32.totalorder %s33, 0
      %p221 = por %p219, %p220
      %p222 = scmp.ne.s32.totalorder %s214, %s216
      %p223 = scmp.eq.s32.totalorder %s38, 1
      %p224 = por %p222, %p223
      %p225 = scmp.ne.s32.totalorder %s216, %s217
      %p226 = scmp.eq.s32.totalorder %s38, 0
      %p227 = por %p225, %p226
      %p228 = scmp.ne.s32.totalorder %s216, %s217
      %p229 = scmp.eq.s32.totalorder %s39, 1
      %p230 = por %p228, %p229
      %p232 = scmp.ne.s32.totalorder %s217, %s231
      %p233 = scmp.eq.s32.totalorder %s39, 0
      %p234 = por %p232, %p233
      %s236 = sadd.s32 %s235, 1
      %p239 = scmp.eq.s32.totalorder %s33, 1
      %p240 = scmp.ne.s32.totalorder %s235, %s237
      %p241 = scmp.eq.s32.totalorder %s33, 0
      %p242 = por %p240, %p241
      %p243 = scmp.ne.s32.totalorder %s235, %s237
      %p244 = scmp.eq.s32.totalorder %s38, 1
      %p245 = por %p243, %p244
      %p246 = scmp.ne.s32.totalorder %s237, %s238
      %p247 = scmp.eq.s32.totalorder %s38, 0
      %p248 = por %p246, %p247
      %p249 = scmp.ne.s32.totalorder %s237, %s238
      %p250 = scmp.eq.s32.totalorder %s39, 1
      %p251 = por %p249, %p250
      %p253 = scmp.ne.s32.totalorder %s238, %s252
      %p254 = scmp.eq.s32.totalorder %s39, 0
      %p255 = por %p253, %p254
      %s257 = sadd.s32 %s256, 1
      %p260 = scmp.eq.s32.totalorder %s33, 1
      %p261 = scmp.ne.s32.totalorder %s256, %s258
      %p262 = scmp.eq.s32.totalorder %s33, 0
      %p263 = por %p261, %p262
      %p264 = scmp.ne.s32.totalorder %s256, %s258
      %p265 = scmp.eq.s32.totalorder %s38, 1
      %p266 = por %p264, %p265
      %p267 = scmp.ne.s32.totalorder %s258, %s259
      %p268 = scmp.eq.s32.totalorder %s38, 0
      %p269 = por %p267, %p268
      %p270 = scmp.ne.s32.totalorder %s258, %s259
      %p271 = scmp.eq.s32.totalorder %s39, 1
      %p272 = por %p270, %p271
      %p274 = scmp.ne.s32.totalorder %s259, %s273
      %p275 = scmp.eq.s32.totalorder %s39, 0
      %p276 = por %p274, %p275
      %s278 = sadd.s32 %s277, 1
      %p281 = scmp.eq.s32.totalorder %s33, 1
      %p282 = scmp.ne.s32.totalorder %s277, %s279
      %p283 = scmp.eq.s32.totalorder %s33, 0
      %p284 = por %p282, %p283
      %p285 = scmp.ne.s32.totalorder %s277, %s279
      %p286 = scmp.eq.s32.totalorder %s38, 1
      %p287 = por %p285, %p286
      %p288 = scmp.ne.s32.totalorder %s279, %s280
      %p289 = scmp.eq.s32.totalorder %s38, 0
      %p290 = por %p288, %p289
      %p291 = scmp.ne.s32.totalorder %s279, %s280
      %p292 = scmp.eq.s32.totalorder %s39, 1
      %p293 = por %p291, %p292
      %p295 = scmp.ne.s32.totalorder %s280, %s294
      %p296 = scmp.eq.s32.totalorder %s39, 0
      %p297 = por %p295, %p296
      %s299 = sadd.s32 %s298, 1
      %p302 = scmp.eq.s32.totalorder %s33, 1
      %p303 = scmp.ne.s32.totalorder %s298, %s300
      %p304 = scmp.eq.s32.totalorder %s33, 0
      %p305 = por %p303, %p304
      %p306 = scmp.ne.s32.totalorder %s298, %s300
      %p307 = scmp.eq.s32.totalorder %s38, 1
      %p308 = por %p306, %p307
      %p309 = scmp.ne.s32.totalorder %s300, %s301
      %p310 = scmp.eq.s32.totalorder %s38, 0
      %p311 = por %p309, %p310
      %p312 = scmp.ne.s32.totalorder %s300, %s301
      %p313 = scmp.eq.s32.totalorder %s39, 1
      %p314 = por %p312, %p313
      %p316 = scmp.ne.s32.totalorder %s301, %s315
      %p317 = scmp.eq.s32.totalorder %s39, 0
      %p318 = por %p316, %p317
      %s320 = sadd.s32 %s319, 1
      %p323 = scmp.eq.s32.totalorder %s33, 1
      %p324 = scmp.ne.s32.totalorder %s319, %s321
      %p325 = scmp.eq.s32.totalorder %s33, 0
      %p326 = por %p324, %p325
      %p327 = scmp.ne.s32.totalorder %s319, %s321
      %p328 = scmp.eq.s32.totalorder %s38, 1
      %p329 = por %p327, %p328
      %p330 = scmp.ne.s32.totalorder %s321, %s322
      %p331 = scmp.eq.s32.totalorder %s38, 0
      %p332 = por %p330, %p331
      %p333 = scmp.ne.s32.totalorder %s321, %s322
      %p334 = scmp.eq.s32.totalorder %s39, 1
      %p335 = por %p333, %p334
      %p337 = scmp.ne.s32.totalorder %s322, %s336
      %p338 = scmp.eq.s32.totalorder %s39, 0
      %p339 = por %p337, %p338
      %s341 = sadd.s32 %s340, 1
      %p344 = scmp.eq.s32.totalorder %s33, 1
      %p345 = scmp.ne.s32.totalorder %s340, %s342
      %p346 = scmp.eq.s32.totalorder %s33, 0
      %p347 = por %p345, %p346
      %p348 = scmp.ne.s32.totalorder %s340, %s342
      %p349 = scmp.eq.s32.totalorder %s38, 1
      %p350 = por %p348, %p349
      %p351 = scmp.ne.s32.totalorder %s342, %s343
      %p352 = scmp.eq.s32.totalorder %s38, 0
      %p353 = por %p351, %p352
      %p354 = scmp.ne.s32.totalorder %s342, %s343
      %p355 = scmp.eq.s32.totalorder %s39, 1
      %p356 = por %p354, %p355
      %p358 = scmp.ne.s32.totalorder %s343, %s357
      %p359 = scmp.eq.s32.totalorder %s39, 0
      %p360 = por %p358, %p359
      %s362 = sadd.s32 %s361, 1
      %p365 = scmp.eq.s32.totalorder %s33, 1
      %p366 = scmp.ne.s32.totalorder %s361, %s363
      %p367 = scmp.eq.s32.totalorder %s33, 0
      %p368 = por %p366, %p367
      %p369 = scmp.ne.s32.totalorder %s361, %s363
      %p370 = scmp.eq.s32.totalorder %s38, 1
      %p371 = por %p369, %p370
      %p372 = scmp.ne.s32.totalorder %s363, %s364
      %p373 = scmp.eq.s32.totalorder %s38, 0
      %p374 = por %p372, %p373
      %p375 = scmp.ne.s32.totalorder %s363, %s364
      %p376 = scmp.eq.s32.totalorder %s39, 1
      %p377 = por %p375, %p376
      %p379 = scmp.ne.s32.totalorder %s364, %s378
      %p380 = scmp.eq.s32.totalorder %s39, 0
      %p381 = por %p379, %p380
      %s383 = sadd.s32 %s382, 1
      %p386 = scmp.eq.s32.totalorder %s33, 1
      %p387 = scmp.ne.s32.totalorder %s382, %s384
      %p388 = scmp.eq.s32.totalorder %s33, 0
      %p389 = por %p387, %p388
      %p390 = scmp.ne.s32.totalorder %s382, %s384
      %p391 = scmp.eq.s32.totalorder %s38, 1
      %p392 = por %p390, %p391
      %p393 = scmp.ne.s32.totalorder %s384, %s385
      %p394 = scmp.eq.s32.totalorder %s38, 0
      %p395 = por %p393, %p394
      %p396 = scmp.ne.s32.totalorder %s384, %s385
      %p397 = scmp.eq.s32.totalorder %s39, 1
      %p398 = por %p396, %p397
      %p400 = scmp.ne.s32.totalorder %s385, %s399
      %p401 = scmp.eq.s32.totalorder %s39, 0
      %p402 = por %p400, %p401
      %s403 = ssub.s32 %s33, %s40
      %p404 = scmp.eq.s32.totalorder %s403, 0
      %s406 = sadd.s32 %s405, 1
      %s407 = scalar_select %p404, %s405, %s406
      %p410 = pneg %p404
      %p411 = scmp.eq.s32.totalorder %s33, 1
      %p412 = por %p410, %p411
      %p413 = scmp.ne.s32.totalorder %s405, %s408
      %p414 = scmp.eq.s32.totalorder %s33, 0
      %p415 = por %p413, %p414
      %p416 = scmp.ne.s32.totalorder %s405, %s408
      %p417 = scmp.eq.s32.totalorder %s38, 1
      %p418 = por %p416, %p417
      %p419 = scmp.ne.s32.totalorder %s408, %s409
      %p420 = scmp.eq.s32.totalorder %s38, 0
      %p421 = por %p419, %p420
      %p422 = scmp.ne.s32.totalorder %s408, %s409
      %p423 = scmp.eq.s32.totalorder %s39, 1
      %p424 = por %p422, %p423
      %p426 = scmp.ne.s32.totalorder %s409, %s425
      %p427 = scmp.eq.s32.totalorder %s39, 0
      %p428 = por %p426, %p427
      %p429 = scmp.le.s32.totalorder 1, %s33
      %p430 = scmp.lt.s32.totalorder %s33, 3
      %p431 = pnand %p429, %p430
      %p432 = pneg %p431
      // Predicated region
      $region9: #{tpu_custom_call.1} parent=5 // pred_check
        _
      $region10: #{tpu_custom_call.1} parent=5 // pred_check_branch
        %434 = sbr.rel (%p431) target = $region12
      $region11: #{tpu_custom_call.1} parent=5 // pred_region
        %s435 = ssub.s32 %s33, 1
        // Predicated region
        $region13: #{tpu_custom_call.1} parent=11 // pred_check
          %p436 = pneg %p80
        $region14: #{tpu_custom_call.1} parent=11 // pred_check_branch
          %438 = sbr.rel (%p436) target = $region16
        $region15: #{tpu_custom_call.1} parent=11 // pred_region
          %s440 = ssub.s32 2048, 2048
          %441 = vsyncadd [#allocation6], %s440
          %s442 = sshll.u32 [#allocation5], 4
          %s443 = int_to_ptr.vmem [resolvable:$true] %s442
          %448 = dma.hbm_to_vmem [thread:$0]  %s1, 2048, %s443, [#allocation6], 128, 128, 8
        $region16: #{tpu_custom_call.1} parent=11 // pred_fallthru
          _
        // Predicated region
        $region17: #{tpu_custom_call.1} parent=11 // pred_check
          %p449 = pneg %p101
        $region18: #{tpu_custom_call.1} parent=11 // pred_check_branch
          %451 = sbr.rel (%p449) target = $region20
        $region19: #{tpu_custom_call.1} parent=11 // pred_region
          _
        $region20: #{tpu_custom_call.1} parent=11 // pred_fallthru
          _
        // Predicated region
        $region21: #{tpu_custom_call.1} parent=11 // pred_check
          %p452 = pneg %p122
        $region22: #{tpu_custom_call.1} parent=11 // pred_check_branch
          %454 = sbr.rel (%p452) target = $region24
        $region23: #{tpu_custom_call.1} parent=11 // pred_region
          %s456 = ssub.s32 2048, 2048
          %457 = vsyncadd [#allocation6], %s456
          %s458 = sshll.u32 [#allocation7], 4
          %s459 = int_to_ptr.vmem [resolvable:$true] %s458
          %464 = dma.hbm_to_vmem [thread:$0]  %s3, 2048, %s459, [#allocation6], 128, 128, 8
        $region24: #{tpu_custom_call.1} parent=11 // pred_fallthru
          _
        // Predicated region
        $region25: #{tpu_custom_call.1} parent=11 // pred_check
          %p465 = pneg %p143
        $region26: #{tpu_custom_call.1} parent=11 // pred_check_branch
          %467 = sbr.rel (%p465) target = $region28
        $region27: #{tpu_custom_call.1} parent=11 // pred_region
          _
        $region28: #{tpu_custom_call.1} parent=11 // pred_fallthru
          _
        // Predicated region
        $region29: #{tpu_custom_call.1} parent=11 // pred_check
          %p468 = pneg %p164
        $region30: #{tpu_custom_call.1} parent=11 // pred_check_branch
          %470 = sbr.rel (%p468) target = $region32
        $region31: #{tpu_custom_call.1} parent=11 // pred_region
          %s472 = ssub.s32 2048, 2048
          %473 = vsyncadd [#allocation9], %s472
          %s474 = sshll.u32 [#allocation8], 4
          %s475 = int_to_ptr.vmem [resolvable:$true] %s474
          %480 = dma.hbm_to_vmem [thread:$0]  %s5, 2048, %s475, [#allocation9], 128, 128, 8
        $region32: #{tpu_custom_call.1} parent=11 // pred_fallthru
          _
        // Predicated region
        $region33: #{tpu_custom_call.1} parent=11 // pred_check
          %p481 = pneg %p185
        $region34: #{tpu_custom_call.1} parent=11 // pred_check_branch
          %483 = sbr.rel (%p481) target = $region36
        $region35: #{tpu_custom_call.1} parent=11 // pred_region
          _
        $region36: #{tpu_custom_call.1} parent=11 // pred_fallthru
          _
        // Predicated region
        $region37: #{tpu_custom_call.1} parent=11 // pred_check
          %p484 = pneg %p206
        $region38: #{tpu_custom_call.1} parent=11 // pred_check_branch
          %486 = sbr.rel (%p484) target = $region40
        $region39: #{tpu_custom_call.1} parent=11 // pred_region
          %s488 = ssub.s32 2048, 2048
          %489 = vsyncadd [#allocation9], %s488
          %s490 = sshll.u32 [#allocation10], 4
          %s491 = int_to_ptr.vmem [resolvable:$true] %s490
          %496 = dma.hbm_to_vmem [thread:$0]  %s7, 2048, %s491, [#allocation9], 128, 128, 8
        $region40: #{tpu_custom_call.1} parent=11 // pred_fallthru
          _
        // Predicated region
        $region41: #{tpu_custom_call.1} parent=11 // pred_check
          %p497 = pneg %p227
        $region42: #{tpu_custom_call.1} parent=11 // pred_check_branch
          %499 = sbr.rel (%p497) target = $region44
        $region43: #{tpu_custom_call.1} parent=11 // pred_region
          _
        $region44: #{tpu_custom_call.1} parent=11 // pred_fallthru
          _
        // Predicated region
        $region45: #{tpu_custom_call.1} parent=11 // pred_check
          %p500 = pneg %p248
        $region46: #{tpu_custom_call.1} parent=11 // pred_check_branch
          %502 = sbr.rel (%p500) target = $region48
        $region47: #{tpu_custom_call.1} parent=11 // pred_region
          %s504 = ssub.s32 2048, 2048
          %505 = vsyncadd [#allocation12], %s504
          %s506 = sshll.u32 [#allocation11], 4
          %s507 = int_to_ptr.vmem [resolvable:$true] %s506
          %512 = dma.hbm_to_vmem [thread:$0]  %s9, 2048, %s507, [#allocation12], 128, 128, 8
        $region48: #{tpu_custom_call.1} parent=11 // pred_fallthru
          _
        // Predicated region
        $region49: #{tpu_custom_call.1} parent=11 // pred_check
          %p513 = pneg %p269
        $region50: #{tpu_custom_call.1} parent=11 // pred_check_branch
          %515 = sbr.rel (%p513) target = $region52
        $region51: #{tpu_custom_call.1} parent=11 // pred_region
          _
        $region52: #{tpu_custom_call.1} parent=11 // pred_fallthru
          _
        // Predicated region
        $region53: #{tpu_custom_call.1} parent=11 // pred_check
          %p516 = pneg %p290
        $region54: #{tpu_custom_call.1} parent=11 // pred_check_branch
          %518 = sbr.rel (%p516) target = $region56
        $region55: #{tpu_custom_call.1} parent=11 // pred_region
          %s520 = ssub.s32 2048, 2048
          %521 = vsyncadd [#allocation12], %s520
          %s522 = sshll.u32 [#allocation13], 4
          %s523 = int_to_ptr.vmem [resolvable:$true] %s522
          %528 = dma.hbm_to_vmem [thread:$0]  %s11, 2048, %s523, [#allocation12], 128, 128, 8
        $region56: #{tpu_custom_call.1} parent=11 // pred_fallthru
          _
        // Predicated region
        $region57: #{tpu_custom_call.1} parent=11 // pred_check
          %p529 = pneg %p311
        $region58: #{tpu_custom_call.1} parent=11 // pred_check_branch
          %531 = sbr.rel (%p529) target = $region60
        $region59: #{tpu_custom_call.1} parent=11 // pred_region
          _
        $region60: #{tpu_custom_call.1} parent=11 // pred_fallthru
          _
        // Predicated region
        $region61: #{tpu_custom_call.1} parent=11 // pred_check
          %p532 = pneg %p332
        $region62: #{tpu_custom_call.1} parent=11 // pred_check_branch
          %534 = sbr.rel (%p532) target = $region64
        $region63: #{tpu_custom_call.1} parent=11 // pred_region
          %s536 = ssub.s32 2048, 2048
          %537 = vsyncadd [#allocation15], %s536
          %s538 = sshll.u32 [#allocation14], 4
          %s539 = int_to_ptr.vmem [resolvable:$true] %s538
          %544 = dma.hbm_to_vmem [thread:$0]  %s13, 2048, %s539, [#allocation15], 128, 128, 8
        $region64: #{tpu_custom_call.1} parent=11 // pred_fallthru
          _
        // Predicated region
        $region65: #{tpu_custom_call.1} parent=11 // pred_check
          %p545 = pneg %p353
        $region66: #{tpu_custom_call.1} parent=11 // pred_check_branch
          %547 = sbr.rel (%p545) target = $region68
        $region67: #{tpu_custom_call.1} parent=11 // pred_region
          _
        $region68: #{tpu_custom_call.1} parent=11 // pred_fallthru
          _
        // Predicated region
        $region69: #{tpu_custom_call.1} parent=11 // pred_check
          %p548 = pneg %p374
        $region70: #{tpu_custom_call.1} parent=11 // pred_check_branch
          %550 = sbr.rel (%p548) target = $region72
        $region71: #{tpu_custom_call.1} parent=11 // pred_region
          %s552 = ssub.s32 2048, 2048
          %553 = vsyncadd [#allocation15], %s552
          %s554 = sshll.u32 [#allocation16], 4
          %s555 = int_to_ptr.vmem [resolvable:$true] %s554
          %560 = dma.hbm_to_vmem [thread:$0]  %s15, 2048, %s555, [#allocation15], 128, 128, 8
        $region72: #{tpu_custom_call.1} parent=11 // pred_fallthru
          _
        // Predicated region
        $region73: #{tpu_custom_call.1} parent=11 // pred_check
          %p561 = pneg %p395
        $region74: #{tpu_custom_call.1} parent=11 // pred_check_branch
          %563 = sbr.rel (%p561) target = $region76
        $region75: #{tpu_custom_call.1} parent=11 // pred_region
          _
        $region76: #{tpu_custom_call.1} parent=11 // pred_fallthru
          _
      $region12: #{tpu_custom_call.1} parent=5 // pred_fallthru
        _
      %p564 = scmp.lt.s32.totalorder %s33, 2
      // Predicated region
      $region77: #{tpu_custom_call.1} parent=5 // pred_check
        %p565 = pneg %p564
      $region78: #{tpu_custom_call.1} parent=5 // pred_check_branch
        %567 = sbr.rel (%p565) target = $region80
      $region79: #{tpu_custom_call.1} parent=5 // pred_region
        // Predicated region
        $region81: #{tpu_custom_call.1} parent=79 // pred_check
          %p568 = pneg %p53
        $region82: #{tpu_custom_call.1} parent=79 // pred_check_branch
          %570 = sbr.rel (%p568) target = $region84
        $region83: #{tpu_custom_call.1} parent=79 // pred_region
          %s571 = sand.u32 %s43, 1
          %s572 = scalar_lea.sflag [#allocation3], %s571
          %s573 = sand.u32 %s43, 1
          %s574 = smul.addr %s573, 16
          %s575 = scalar_lea.vmem [#allocation2], %s574
          %s576 = smul.u32 2, %s33
          %s578 = ssub.s32 256, 256
          %579 = vsyncadd %s572, %s578
          %s580 = smul.addr %s576, 128
          %s581 = scalar_lea.hbm %s0, %s580
          %s582 = sshll.u32 %s575, 4
          %s583 = int_to_ptr.vmem [resolvable:$true] %s582
          %588 = dma.hbm_to_vmem [thread:$0]  %s581, 256, %s583, %s572, 128, 128, 8
        $region84: #{tpu_custom_call.1} parent=79 // pred_fallthru
          _
      $region80: #{tpu_custom_call.1} parent=5 // pred_fallthru
        _
      %p589 = scmp.le.s32.totalorder 1, %s33
      %p590 = scmp.lt.s32.totalorder %s33, 3
      %p591 = pnand %p589, %p590
      %p592 = pneg %p591
      // Predicated region
      $region85: #{tpu_custom_call.1} parent=5 // pred_check
        _
      $region86: #{tpu_custom_call.1} parent=5 // pred_check_branch
        %594 = sbr.rel (%p591) target = $region88
      $region87: #{tpu_custom_call.1} parent=5 // pred_region
        %s595 = ssub.s32 %s33, 1
        %s596 = sand.u32 %s46, 1
        %s597 = scalar_lea.sflag [#allocation3], %s596
        %s598 = sand.u32 %s46, 1
        %s599 = smul.addr %s598, 16
        %s600 = scalar_lea.vmem [#allocation2], %s599
        // Predicated region
        $region89: #{tpu_custom_call.1} parent=87 // pred_check
          %p601 = pneg %p59
        $region90: #{tpu_custom_call.1} parent=87 // pred_check_branch
          %603 = sbr.rel (%p601) target = $region92
        $region91: #{tpu_custom_call.1} parent=87 // pred_region
          %604 = dma.done %s597, 256
        $region92: #{tpu_custom_call.1} parent=87 // pred_fallthru
          _
        // Predicated region
        $region93: #{tpu_custom_call.1} parent=87 // pred_check
          %p605 = pneg %p80
        $region94: #{tpu_custom_call.1} parent=87 // pred_check_branch
          %607 = sbr.rel (%p605) target = $region96
        $region95: #{tpu_custom_call.1} parent=87 // pred_region
          %608 = dma.done [#allocation6], 2048
        $region96: #{tpu_custom_call.1} parent=87 // pred_fallthru
          _
        // Predicated region
        $region97: #{tpu_custom_call.1} parent=87 // pred_check
          %p609 = pneg %p122
        $region98: #{tpu_custom_call.1} parent=87 // pred_check_branch
          %611 = sbr.rel (%p609) target = $region100
        $region99: #{tpu_custom_call.1} parent=87 // pred_region
          %612 = dma.done [#allocation6], 2048
        $region100: #{tpu_custom_call.1} parent=87 // pred_fallthru
          _
        // Predicated region
        $region101: #{tpu_custom_call.1} parent=87 // pred_check
          %p613 = pneg %p164
        $region102: #{tpu_custom_call.1} parent=87 // pred_check_branch
          %615 = sbr.rel (%p613) target = $region104
        $region103: #{tpu_custom_call.1} parent=87 // pred_region
          %616 = dma.done [#allocation9], 2048
        $region104: #{tpu_custom_call.1} parent=87 // pred_fallthru
          _
        // Predicated region
        $region105: #{tpu_custom_call.1} parent=87 // pred_check
          %p617 = pneg %p206
        $region106: #{tpu_custom_call.1} parent=87 // pred_check_branch
          %619 = sbr.rel (%p617) target = $region108
        $region107: #{tpu_custom_call.1} parent=87 // pred_region
          %620 = dma.done [#allocation9], 2048
        $region108: #{tpu_custom_call.1} parent=87 // pred_fallthru
          _
        // Predicated region
        $region109: #{tpu_custom_call.1} parent=87 // pred_check
          %p621 = pneg %p248
        $region110: #{tpu_custom_call.1} parent=87 // pred_check_branch
          %623 = sbr.rel (%p621) target = $region112
        $region111: #{tpu_custom_call.1} parent=87 // pred_region
          %624 = dma.done [#allocation12], 2048
        $region112: #{tpu_custom_call.1} parent=87 // pred_fallthru
          _
        // Predicated region
        $region113: #{tpu_custom_call.1} parent=87 // pred_check
          %p625 = pneg %p290
        $region114: #{tpu_custom_call.1} parent=87 // pred_check_branch
          %627 = sbr.rel (%p625) target = $region116
        $region115: #{tpu_custom_call.1} parent=87 // pred_region
          %628 = dma.done [#allocation12], 2048
        $region116: #{tpu_custom_call.1} parent=87 // pred_fallthru
          _
        // Predicated region
        $region117: #{tpu_custom_call.1} parent=87 // pred_check
          %p629 = pneg %p332
        $region118: #{tpu_custom_call.1} parent=87 // pred_check_branch
          %631 = sbr.rel (%p629) target = $region120
        $region119: #{tpu_custom_call.1} parent=87 // pred_region
          %632 = dma.done [#allocation15], 2048
        $region120: #{tpu_custom_call.1} parent=87 // pred_fallthru
          _
        // Predicated region
        $region121: #{tpu_custom_call.1} parent=87 // pred_check
          %p633 = pneg %p374
        $region122: #{tpu_custom_call.1} parent=87 // pred_check_branch
          %635 = sbr.rel (%p633) target = $region124
        $region123: #{tpu_custom_call.1} parent=87 // pred_region
          %636 = dma.done [#allocation15], 2048
        $region124: #{tpu_custom_call.1} parent=87 // pred_fallthru
          _
        %s637 = sand.u32 %s46, 1
        %s638 = scalar_lea.sflag [#allocation3], %s637
        %s639 = sand.u32 %s46, 1
        %s640 = smul.addr %s639, 16
        %s641 = scalar_lea.vmem [#allocation2], %s640
        %p642 = pneg %p59
        %p643 = pneg %p56
        %p644 = pneg %p80
        %p645 = pneg %p77
        %p646 = pneg %p101
        %p647 = pneg %p98
        %p648 = pneg %p122
        %p649 = pneg %p119
        %p650 = pneg %p143
        %p651 = pneg %p140
        %p652 = pneg %p164
        %p653 = pneg %p161
        %p654 = pneg %p185
        %p655 = pneg %p182
        %p656 = pneg %p206
        %p657 = pneg %p203
        %p658 = pneg %p227
        %p659 = pneg %p224
        %p660 = pneg %p248
        %p661 = pneg %p245
        %p662 = pneg %p269
        %p663 = pneg %p266
        %p664 = pneg %p290
        %p665 = pneg %p287
        %p666 = pneg %p311
        %p667 = pneg %p308
        %p668 = pneg %p332
        %p669 = pneg %p329
        %p670 = pneg %p353
        %p671 = pneg %p350
        %p672 = pneg %p374
        %p673 = pneg %p371
        %p674 = pneg %p395
        %p675 = pneg %p392
        %p676 = pneg %p421
        %p677 = pneg %p418
        %s678 = sand.u32 %s408, 1
        %s679 = scalar_lea.sflag [#allocation4], %s678
        %s680 = sand.u32 %s408, 1
        %s681 = smul.addr %s680, 80
        %s682 = scalar_lea.vmem [#allocation17], %s681
        %s683 = smul.u32 2, %s38
        %s684 = smul.u32 2, %s38
        %v685 = vld [vmem:[%s600] sm:$0xff]
        %v686 = vld [vmem:[%s600 + $0x8] sm:$0xff]
        %v687 = vld [vmem:[#allocation5] sm:$0xff]
        %v688 = vld [vmem:[#allocation5 + $0x8] sm:$0xff]
        %v689 = vld [vmem:[#allocation5 + $0x10] sm:$0xff]
        %v690 = vld [vmem:[#allocation5 + $0x18] sm:$0xff]
        %v691 = vld [vmem:[#allocation5 + $0x20] sm:$0xff]
        %v692 = vld [vmem:[#allocation5 + $0x28] sm:$0xff]
        %v693 = vld [vmem:[#allocation5 + $0x30] sm:$0xff]
        %v694 = vld [vmem:[#allocation5 + $0x38] sm:$0xff]
        %v695 = vld [vmem:[#allocation5 + $0x40] sm:$0xff]
        %v696 = vld [vmem:[#allocation5 + $0x48] sm:$0xff]
        %v697 = vld [vmem:[#allocation5 + $0x50] sm:$0xff]
        %v698 = vld [vmem:[#allocation5 + $0x58] sm:$0xff]
        %v699 = vld [vmem:[#allocation5 + $0x60] sm:$0xff]
        %v700 = vld [vmem:[#allocation5 + $0x68] sm:$0xff]
        %v701 = vld [vmem:[#allocation5 + $0x70] sm:$0xff]
        %v702 = vld [vmem:[#allocation5 + $0x78] sm:$0xff]
        %v703 = vld [vmem:[%s2] sm:$0x1]
        %v705 = vlaneseq
        %v706 = vshrl.u32 %v705, 7
        %v707 = vsub.s32 0, %v706
        %v708 = vrot.slane %v703, %v707
        %710 = vmatprep.subr.mxu0 0.0
        %711 = vmatpush1.msra.mxu0 %v702
        %712 = vmatprep.subr.mxu0 0.0
        %713 = vmatpush1.msra.mxu0 %v701
        %714 = vmatprep.subr.mxu0 0.0
        %715 = vmatpush1.msra.mxu0 %v700
        %716 = vmatprep.subr.mxu0 0.0
        %717 = vmatpush1.msra.mxu0 %v699
        %718 = vmatprep.subr.mxu0 0.0
        %719 = vmatpush1.msra.mxu0 %v698
        %720 = vmatprep.subr.mxu0 0.0
        %721 = vmatpush1.msra.mxu0 %v697
        %722 = vmatprep.subr.mxu0 0.0
        %723 = vmatpush1.msra.mxu0 %v696
        %724 = vmatprep.subr.mxu0 0.0
        %725 = vmatpush1.msra.mxu0 %v695
        %726 = vmatprep.subr.mxu0 0.0
        %727 = vmatpush1.msra.mxu0 %v694
        %728 = vmatprep.subr.mxu0 0.0
        %729 = vmatpush1.msra.mxu0 %v693
        %730 = vmatprep.subr.mxu0 0.0
        %731 = vmatpush1.msra.mxu0 %v692
        %732 = vmatprep.subr.mxu0 0.0
        %733 = vmatpush1.msra.mxu0 %v691
        %734 = vmatprep.subr.mxu0 0.0
        %735 = vmatpush1.msra.mxu0 %v690
        %736 = vmatprep.subr.mxu0 0.0
        %737 = vmatpush1.msra.mxu0 %v689
        %738 = vmatprep.subr.mxu0 0.0
        %739 = vmatpush1.msra.mxu0 %v688
        %740 = vmatprep.subr.mxu0 0.0
        %741 = vmatpush1.msra.mxu0 %v687
        %742 = vmatprep.subr.mxu0 0.0
        %743 = vmatpush2.msra.mxu0 0.0
        %744 = vmatprep.subr.mxu0 0.0
        %745 = vmatpush2.msra.mxu0 0.0
        %746 = vmatprep.subr.mxu0 0.0
        %747 = vmatpush2.msra.mxu0 0.0
        %748 = vmatprep.subr.mxu0 0.0
        %749 = vmatpush2.msra.mxu0 0.0
        %750 = vmatprep.subr.mxu0 0.0
        %751 = vmatpush2.msra.mxu0 0.0
        %752 = vmatprep.subr.mxu0 0.0
        %753 = vmatpush2.msra.mxu0 0.0
        %754 = vmatprep.subr.mxu0 0.0
        %755 = vmatpush2.msra.mxu0 0.0
        %756 = vmatprep.subr.mxu0 0.0
        %757 = vmatpush2.msra.mxu0 0.0
        %758 = vmatprep.subr.mxu0 0.0
        %759 = vmatpush2.msra.mxu0 0.0
        %760 = vmatprep.subr.mxu0 0.0
        %761 = vmatpush2.msra.mxu0 0.0
        %762 = vmatprep.subr.mxu0 0.0
        %763 = vmatpush2.msra.mxu0 0.0
        %764 = vmatprep.subr.mxu0 0.0
        %765 = vmatpush2.msra.mxu0 0.0
        %766 = vmatprep.subr.mxu0 0.0
        %767 = vmatpush2.msra.mxu0 0.0
        %768 = vmatprep.subr.mxu0 0.0
        %769 = vmatpush2.msra.mxu0 0.0
        %770 = vmatprep.subr.mxu0 0.0
        %771 = vmatpush2.msra.mxu0 0.0
        %772 = vmatprep.subr.mxu0 0.0
        %773 = vmatpush2.msra.mxu0 0.0
        %774 = vmatprep.mubr.f32.mxu0 0.0
        %775 = vmatmul.mubr.f32.gmra.mxu0 %v685
        %v776 = vpop.f32.mrf.mxu0
        %v777 = vadd.f32 %v708, %v776
        %v778 = vpop.f32.mrf.mxu0
        %779 = vmatprep.mubr.f32.mxu0 0.0
        %780 = vmatmul.mubr.f32.gmra.mxu0 %v686
        %v781 = vpop.f32.mrf.mxu0
        %v782 = vadd.f32 %v708, %v781
        %v783 = vpop.f32.mrf.mxu0
        %784 = vdwg.mxu0
        %v785 = vmax.f32 %v777, 0.0
        %v786 = vmax.f32 %v782, 0.0
        %787 = vst [vmem:[%s682 + $0x8] sm:$0xff] %v785
        %788 = vst [vmem:[%s682 + $0x30] sm:$0xff] %v786
        %v789 = vld [vmem:[#allocation7] sm:$0xff]
        %v790 = vld [vmem:[#allocation7 + $0x8] sm:$0xff]
        %v791 = vld [vmem:[#allocation7 + $0x10] sm:$0xff]
        %v792 = vld [vmem:[#allocation7 + $0x18] sm:$0xff]
        %v793 = vld [vmem:[#allocation7 + $0x20] sm:$0xff]
        %v794 = vld [vmem:[#allocation7 + $0x28] sm:$0xff]
        %v795 = vld [vmem:[#allocation7 + $0x30] sm:$0xff]
        %v796 = vld [vmem:[#allocation7 + $0x38] sm:$0xff]
        %v797 = vld [vmem:[#allocation7 + $0x40] sm:$0xff]
        %v798 = vld [vmem:[#allocation7 + $0x48] sm:$0xff]
        %v799 = vld [vmem:[#allocation7 + $0x50] sm:$0xff]
        %v800 = vld [vmem:[#allocation7 + $0x58] sm:$0xff]
        %v801 = vld [vmem:[#allocation7 + $0x60] sm:$0xff]
        %v802 = vld [vmem:[#allocation7 + $0x68] sm:$0xff]
        %v803 = vld [vmem:[#allocation7 + $0x70] sm:$0xff]
        %v804 = vld [vmem:[#allocation7 + $0x78] sm:$0xff]
        %v805 = vld [vmem:[%s4] sm:$0x1]
        %v807 = vlaneseq
        %v808 = vshrl.u32 %v807, 7
        %v809 = vsub.s32 0, %v808
        %v810 = vrot.slane %v805, %v809
        %812 = vmatprep.subr.mxu0 0.0
        %813 = vmatpush1.msra.mxu0 %v804
        %814 = vmatprep.subr.mxu0 0.0
        %815 = vmatpush1.msra.mxu0 %v803
        %816 = vmatprep.subr.mxu0 0.0
        %817 = vmatpush1.msra.mxu0 %v802
        %818 = vmatprep.subr.mxu0 0.0
        %819 = vmatpush1.msra.mxu0 %v801
        %820 = vmatprep.subr.mxu0 0.0
        %821 = vmatpush1.msra.mxu0 %v800
        %822 = vmatprep.subr.mxu0 0.0
        %823 = vmatpush1.msra.mxu0 %v799
        %824 = vmatprep.subr.mxu0 0.0
        %825 = vmatpush1.msra.mxu0 %v798
        %826 = vmatprep.subr.mxu0 0.0
        %827 = vmatpush1.msra.mxu0 %v797
        %828 = vmatprep.subr.mxu0 0.0
        %829 = vmatpush1.msra.mxu0 %v796
        %830 = vmatprep.subr.mxu0 0.0
        %831 = vmatpush1.msra.mxu0 %v795
        %832 = vmatprep.subr.mxu0 0.0
        %833 = vmatpush1.msra.mxu0 %v794
        %834 = vmatprep.subr.mxu0 0.0
        %835 = vmatpush1.msra.mxu0 %v793
        %836 = vmatprep.subr.mxu0 0.0
        %837 = vmatpush1.msra.mxu0 %v792
        %838 = vmatprep.subr.mxu0 0.0
        %839 = vmatpush1.msra.mxu0 %v791
        %840 = vmatprep.subr.mxu0 0.0
        %841 = vmatpush1.msra.mxu0 %v790
        %842 = vmatprep.subr.mxu0 0.0
        %843 = vmatpush1.msra.mxu0 %v789
        %844 = vmatprep.subr.mxu0 0.0
        %845 = vmatpush2.msra.mxu0 0.0
        %846 = vmatprep.subr.mxu0 0.0
        %847 = vmatpush2.msra.mxu0 0.0
        %848 = vmatprep.subr.mxu0 0.0
        %849 = vmatpush2.msra.mxu0 0.0
        %850 = vmatprep.subr.mxu0 0.0
        %851 = vmatpush2.msra.mxu0 0.0
        %852 = vmatprep.subr.mxu0 0.0
        %853 = vmatpush2.msra.mxu0 0.0
        %854 = vmatprep.subr.mxu0 0.0
        %855 = vmatpush2.msra.mxu0 0.0
        %856 = vmatprep.subr.mxu0 0.0
        %857 = vmatpush2.msra.mxu0 0.0
        %858 = vmatprep.subr.mxu0 0.0
        %859 = vmatpush2.msra.mxu0 0.0
        %860 = vmatprep.subr.mxu0 0.0
        %861 = vmatpush2.msra.mxu0 0.0
        %862 = vmatprep.subr.mxu0 0.0
        %863 = vmatpush2.msra.mxu0 0.0
        %864 = vmatprep.subr.mxu0 0.0
        %865 = vmatpush2.msra.mxu0 0.0
        %866 = vmatprep.subr.mxu0 0.0
        %867 = vmatpush2.msra.mxu0 0.0
        %868 = vmatprep.subr.mxu0 0.0
        %869 = vmatpush2.msra.mxu0 0.0
        %870 = vmatprep.subr.mxu0 0.0
        %871 = vmatpush2.msra.mxu0 0.0
        %872 = vmatprep.subr.mxu0 0.0
        %873 = vmatpush2.msra.mxu0 0.0
        %874 = vmatprep.subr.mxu0 0.0
        %875 = vmatpush2.msra.mxu0 0.0
        %876 = vmatprep.mubr.f32.mxu0 0.0
        %877 = vmatmul.mubr.f32.gmra.mxu0 %v785
        %v878 = vpop.f32.mrf.mxu0
        %v879 = vadd.f32 %v810, %v878
        %v880 = vpop.f32.mrf.mxu0
        %881 = vmatprep.mubr.f32.mxu0 0.0
        %882 = vmatmul.mubr.f32.gmra.mxu0 %v786
        %v883 = vpop.f32.mrf.mxu0
        %v884 = vadd.f32 %v810, %v883
        %v885 = vpop.f32.mrf.mxu0
        %886 = vdwg.mxu0
        %v887 = vmax.f32 %v879, 0.0
        %v888 = vmax.f32 %v884, 0.0
        %889 = vst [vmem:[%s682 + $0x10] sm:$0xff] %v887
        %890 = vst [vmem:[%s682 + $0x38] sm:$0xff] %v888
        %v891 = vld [vmem:[#allocation8] sm:$0xff]
        %v892 = vld [vmem:[#allocation8 + $0x8] sm:$0xff]
        %v893 = vld [vmem:[#allocation8 + $0x10] sm:$0xff]
        %v894 = vld [vmem:[#allocation8 + $0x18] sm:$0xff]
        %v895 = vld [vmem:[#allocation8 + $0x20] sm:$0xff]
        %v896 = vld [vmem:[#allocation8 + $0x28] sm:$0xff]
        %v897 = vld [vmem:[#allocation8 + $0x30] sm:$0xff]
        %v898 = vld [vmem:[#allocation8 + $0x38] sm:$0xff]
        %v899 = vld [vmem:[#allocation8 + $0x40] sm:$0xff]
        %v900 = vld [vmem:[#allocation8 + $0x48] sm:$0xff]
        %v901 = vld [vmem:[#allocation8 + $0x50] sm:$0xff]
        %v902 = vld [vmem:[#allocation8 + $0x58] sm:$0xff]
        %v903 = vld [vmem:[#allocation8 + $0x60] sm:$0xff]
        %v904 = vld [vmem:[#allocation8 + $0x68] sm:$0xff]
        %v905 = vld [vmem:[#allocation8 + $0x70] sm:$0xff]
        %v906 = vld [vmem:[#allocation8 + $0x78] sm:$0xff]
        %v907 = vld [vmem:[%s6] sm:$0x1]
        %v909 = vlaneseq
        %v910 = vshrl.u32 %v909, 7
        %v911 = vsub.s32 0, %v910
        %v912 = vrot.slane %v907, %v911
        %914 = vmatprep.subr.mxu0 0.0
        %915 = vmatpush1.msra.mxu0 %v906
        %916 = vmatprep.subr.mxu0 0.0
        %917 = vmatpush1.msra.mxu0 %v905
        %918 = vmatprep.subr.mxu0 0.0
        %919 = vmatpush1.msra.mxu0 %v904
        %920 = vmatprep.subr.mxu0 0.0
        %921 = vmatpush1.msra.mxu0 %v903
        %922 = vmatprep.subr.mxu0 0.0
        %923 = vmatpush1.msra.mxu0 %v902
        %924 = vmatprep.subr.mxu0 0.0
        %925 = vmatpush1.msra.mxu0 %v901
        %926 = vmatprep.subr.mxu0 0.0
        %927 = vmatpush1.msra.mxu0 %v900
        %928 = vmatprep.subr.mxu0 0.0
        %929 = vmatpush1.msra.mxu0 %v899
        %930 = vmatprep.subr.mxu0 0.0
        %931 = vmatpush1.msra.mxu0 %v898
        %932 = vmatprep.subr.mxu0 0.0
        %933 = vmatpush1.msra.mxu0 %v897
        %934 = vmatprep.subr.mxu0 0.0
        %935 = vmatpush1.msra.mxu0 %v896
        %936 = vmatprep.subr.mxu0 0.0
        %937 = vmatpush1.msra.mxu0 %v895
        %938 = vmatprep.subr.mxu0 0.0
        %939 = vmatpush1.msra.mxu0 %v894
        %940 = vmatprep.subr.mxu0 0.0
        %941 = vmatpush1.msra.mxu0 %v893
        %942 = vmatprep.subr.mxu0 0.0
        %943 = vmatpush1.msra.mxu0 %v892
        %944 = vmatprep.subr.mxu0 0.0
        %945 = vmatpush1.msra.mxu0 %v891
        %946 = vmatprep.subr.mxu0 0.0
        %947 = vmatpush2.msra.mxu0 0.0
        %948 = vmatprep.subr.mxu0 0.0
        %949 = vmatpush2.msra.mxu0 0.0
        %950 = vmatprep.subr.mxu0 0.0
        %951 = vmatpush2.msra.mxu0 0.0
        %952 = vmatprep.subr.mxu0 0.0
        %953 = vmatpush2.msra.mxu0 0.0
        %954 = vmatprep.subr.mxu0 0.0
        %955 = vmatpush2.msra.mxu0 0.0
        %956 = vmatprep.subr.mxu0 0.0
        %957 = vmatpush2.msra.mxu0 0.0
        %958 = vmatprep.subr.mxu0 0.0
        %959 = vmatpush2.msra.mxu0 0.0
        %960 = vmatprep.subr.mxu0 0.0
        %961 = vmatpush2.msra.mxu0 0.0
        %962 = vmatprep.subr.mxu0 0.0
        %963 = vmatpush2.msra.mxu0 0.0
        %964 = vmatprep.subr.mxu0 0.0
        %965 = vmatpush2.msra.mxu0 0.0
        %966 = vmatprep.subr.mxu0 0.0
        %967 = vmatpush2.msra.mxu0 0.0
        %968 = vmatprep.subr.mxu0 0.0
        %969 = vmatpush2.msra.mxu0 0.0
        %970 = vmatprep.subr.mxu0 0.0
        %971 = vmatpush2.msra.mxu0 0.0
        %972 = vmatprep.subr.mxu0 0.0
        %973 = vmatpush2.msra.mxu0 0.0
        %974 = vmatprep.subr.mxu0 0.0
        %975 = vmatpush2.msra.mxu0 0.0
        %976 = vmatprep.subr.mxu0 0.0
        %977 = vmatpush2.msra.mxu0 0.0
        %978 = vmatprep.mubr.f32.mxu0 0.0
        %979 = vmatmul.mubr.f32.gmra.mxu0 %v887
        %v980 = vpop.f32.mrf.mxu0
        %v981 = vadd.f32 %v912, %v980
        %v982 = vpop.f32.mrf.mxu0
        %983 = vmatprep.mubr.f32.mxu0 0.0
        %984 = vmatmul.mubr.f32.gmra.mxu0 %v888
        %v985 = vpop.f32.mrf.mxu0
        %v986 = vadd.f32 %v912, %v985
        %v987 = vpop.f32.mrf.mxu0
        %988 = vdwg.mxu0
        %v989 = vmax.f32 %v981, 0.0
        %v990 = vmax.f32 %v986, 0.0
        %991 = vst [vmem:[%s682 + $0x18] sm:$0xff] %v989
        %992 = vst [vmem:[%s682 + $0x40] sm:$0xff] %v990
        %v993 = vld [vmem:[#allocation10] sm:$0xff]
        %v994 = vld [vmem:[#allocation10 + $0x8] sm:$0xff]
        %v995 = vld [vmem:[#allocation10 + $0x10] sm:$0xff]
        %v996 = vld [vmem:[#allocation10 + $0x18] sm:$0xff]
        %v997 = vld [vmem:[#allocation10 + $0x20] sm:$0xff]
        %v998 = vld [vmem:[#allocation10 + $0x28] sm:$0xff]
        %v999 = vld [vmem:[#allocation10 + $0x30] sm:$0xff]
        %v1000 = vld [vmem:[#allocation10 + $0x38] sm:$0xff]
        %v1001 = vld [vmem:[#allocation10 + $0x40] sm:$0xff]
        %v1002 = vld [vmem:[#allocation10 + $0x48] sm:$0xff]
        %v1003 = vld [vmem:[#allocation10 + $0x50] sm:$0xff]
        %v1004 = vld [vmem:[#allocation10 + $0x58] sm:$0xff]
        %v1005 = vld [vmem:[#allocation10 + $0x60] sm:$0xff]
        %v1006 = vld [vmem:[#allocation10 + $0x68] sm:$0xff]
        %v1007 = vld [vmem:[#allocation10 + $0x70] sm:$0xff]
        %v1008 = vld [vmem:[#allocation10 + $0x78] sm:$0xff]
        %v1009 = vld [vmem:[%s8] sm:$0x1]
        %v1011 = vlaneseq
        %v1012 = vshrl.u32 %v1011, 7
        %v1013 = vsub.s32 0, %v1012
        %v1014 = vrot.slane %v1009, %v1013
        %1016 = vmatprep.subr.mxu0 0.0
        %1017 = vmatpush1.msra.mxu0 %v1008
        %1018 = vmatprep.subr.mxu0 0.0
        %1019 = vmatpush1.msra.mxu0 %v1007
        %1020 = vmatprep.subr.mxu0 0.0
        %1021 = vmatpush1.msra.mxu0 %v1006
        %1022 = vmatprep.subr.mxu0 0.0
        %1023 = vmatpush1.msra.mxu0 %v1005
        %1024 = vmatprep.subr.mxu0 0.0
        %1025 = vmatpush1.msra.mxu0 %v1004
        %1026 = vmatprep.subr.mxu0 0.0
        %1027 = vmatpush1.msra.mxu0 %v1003
        %1028 = vmatprep.subr.mxu0 0.0
        %1029 = vmatpush1.msra.mxu0 %v1002
        %1030 = vmatprep.subr.mxu0 0.0
        %1031 = vmatpush1.msra.mxu0 %v1001
        %1032 = vmatprep.subr.mxu0 0.0
        %1033 = vmatpush1.msra.mxu0 %v1000
        %1034 = vmatprep.subr.mxu0 0.0
        %1035 = vmatpush1.msra.mxu0 %v999
        %1036 = vmatprep.subr.mxu0 0.0
        %1037 = vmatpush1.msra.mxu0 %v998
        %1038 = vmatprep.subr.mxu0 0.0
        %1039 = vmatpush1.msra.mxu0 %v997
        %1040 = vmatprep.subr.mxu0 0.0
        %1041 = vmatpush1.msra.mxu0 %v996
        %1042 = vmatprep.subr.mxu0 0.0
        %1043 = vmatpush1.msra.mxu0 %v995
        %1044 = vmatprep.subr.mxu0 0.0
        %1045 = vmatpush1.msra.mxu0 %v994
        %1046 = vmatprep.subr.mxu0 0.0
        %1047 = vmatpush1.msra.mxu0 %v993
        %1048 = vmatprep.subr.mxu0 0.0
        %1049 = vmatpush2.msra.mxu0 0.0
        %1050 = vmatprep.subr.mxu0 0.0
        %1051 = vmatpush2.msra.mxu0 0.0
        %1052 = vmatprep.subr.mxu0 0.0
        %1053 = vmatpush2.msra.mxu0 0.0
        %1054 = vmatprep.subr.mxu0 0.0
        %1055 = vmatpush2.msra.mxu0 0.0
        %1056 = vmatprep.subr.mxu0 0.0
        %1057 = vmatpush2.msra.mxu0 0.0
        %1058 = vmatprep.subr.mxu0 0.0
        %1059 = vmatpush2.msra.mxu0 0.0
        %1060 = vmatprep.subr.mxu0 0.0
        %1061 = vmatpush2.msra.mxu0 0.0
        %1062 = vmatprep.subr.mxu0 0.0
        %1063 = vmatpush2.msra.mxu0 0.0
        %1064 = vmatprep.subr.mxu0 0.0
        %1065 = vmatpush2.msra.mxu0 0.0
        %1066 = vmatprep.subr.mxu0 0.0
        %1067 = vmatpush2.msra.mxu0 0.0
        %1068 = vmatprep.subr.mxu0 0.0
        %1069 = vmatpush2.msra.mxu0 0.0
        %1070 = vmatprep.subr.mxu0 0.0
        %1071 = vmatpush2.msra.mxu0 0.0
        %1072 = vmatprep.subr.mxu0 0.0
        %1073 = vmatpush2.msra.mxu0 0.0
        %1074 = vmatprep.subr.mxu0 0.0
        %1075 = vmatpush2.msra.mxu0 0.0
        %1076 = vmatprep.subr.mxu0 0.0
        %1077 = vmatpush2.msra.mxu0 0.0
        %1078 = vmatprep.subr.mxu0 0.0
        %1079 = vmatpush2.msra.mxu0 0.0
        %1080 = vmatprep.mubr.f32.mxu0 0.0
        %1081 = vmatmul.mubr.f32.gmra.mxu0 %v989
        %v1082 = vpop.f32.mrf.mxu0
        %v1083 = vadd.f32 %v1014, %v1082
        %v1084 = vpop.f32.mrf.mxu0
        %1085 = vmatprep.mubr.f32.mxu0 0.0
        %1086 = vmatmul.mubr.f32.gmra.mxu0 %v990
        %v1087 = vpop.f32.mrf.mxu0
        %v1088 = vadd.f32 %v1014, %v1087
        %v1089 = vpop.f32.mrf.mxu0
        %1090 = vdwg.mxu0
        %1091 = vst [vmem:[%s682 + $0x20] sm:$0xff] %v1083
        %1092 = vst [vmem:[%s682 + $0x48] sm:$0xff] %v1088
        %v1093 = vld [vmem:[#allocation11] sm:$0xff]
        %v1094 = vld [vmem:[#allocation11 + $0x8] sm:$0xff]
        %v1095 = vld [vmem:[#allocation11 + $0x10] sm:$0xff]
        %v1096 = vld [vmem:[#allocation11 + $0x18] sm:$0xff]
        %v1097 = vld [vmem:[#allocation11 + $0x20] sm:$0xff]
        %v1098 = vld [vmem:[#allocation11 + $0x28] sm:$0xff]
        %v1099 = vld [vmem:[#allocation11 + $0x30] sm:$0xff]
        %v1100 = vld [vmem:[#allocation11 + $0x38] sm:$0xff]
        %v1101 = vld [vmem:[#allocation11 + $0x40] sm:$0xff]
        %v1102 = vld [vmem:[#allocation11 + $0x48] sm:$0xff]
        %v1103 = vld [vmem:[#allocation11 + $0x50] sm:$0xff]
        %v1104 = vld [vmem:[#allocation11 + $0x58] sm:$0xff]
        %v1105 = vld [vmem:[#allocation11 + $0x60] sm:$0xff]
        %v1106 = vld [vmem:[#allocation11 + $0x68] sm:$0xff]
        %v1107 = vld [vmem:[#allocation11 + $0x70] sm:$0xff]
        %v1108 = vld [vmem:[#allocation11 + $0x78] sm:$0xff]
        %v1109 = vld [vmem:[%s10] sm:$0x1]
        %v1111 = vlaneseq
        %v1112 = vshrl.u32 %v1111, 7
        %v1113 = vsub.s32 0, %v1112
        %v1114 = vrot.slane %v1109, %v1113
        %1116 = vmatprep.subr.mxu0 0.0
        %1117 = vmatpush1.msra.mxu0 %v1108
        %1118 = vmatprep.subr.mxu0 0.0
        %1119 = vmatpush1.msra.mxu0 %v1107
        %1120 = vmatprep.subr.mxu0 0.0
        %1121 = vmatpush1.msra.mxu0 %v1106
        %1122 = vmatprep.subr.mxu0 0.0
        %1123 = vmatpush1.msra.mxu0 %v1105
        %1124 = vmatprep.subr.mxu0 0.0
        %1125 = vmatpush1.msra.mxu0 %v1104
        %1126 = vmatprep.subr.mxu0 0.0
        %1127 = vmatpush1.msra.mxu0 %v1103
        %1128 = vmatprep.subr.mxu0 0.0
        %1129 = vmatpush1.msra.mxu0 %v1102
        %1130 = vmatprep.subr.mxu0 0.0
        %1131 = vmatpush1.msra.mxu0 %v1101
        %1132 = vmatprep.subr.mxu0 0.0
        %1133 = vmatpush1.msra.mxu0 %v1100
        %1134 = vmatprep.subr.mxu0 0.0
        %1135 = vmatpush1.msra.mxu0 %v1099
        %1136 = vmatprep.subr.mxu0 0.0
        %1137 = vmatpush1.msra.mxu0 %v1098
        %1138 = vmatprep.subr.mxu0 0.0
        %1139 = vmatpush1.msra.mxu0 %v1097
        %1140 = vmatprep.subr.mxu0 0.0
        %1141 = vmatpush1.msra.mxu0 %v1096
        %1142 = vmatprep.subr.mxu0 0.0
        %1143 = vmatpush1.msra.mxu0 %v1095
        %1144 = vmatprep.subr.mxu0 0.0
        %1145 = vmatpush1.msra.mxu0 %v1094
        %1146 = vmatprep.subr.mxu0 0.0
        %1147 = vmatpush1.msra.mxu0 %v1093
        %1148 = vmatprep.subr.mxu0 0.0
        %1149 = vmatpush2.msra.mxu0 0.0
        %1150 = vmatprep.subr.mxu0 0.0
        %1151 = vmatpush2.msra.mxu0 0.0
        %1152 = vmatprep.subr.mxu0 0.0
        %1153 = vmatpush2.msra.mxu0 0.0
        %1154 = vmatprep.subr.mxu0 0.0
        %1155 = vmatpush2.msra.mxu0 0.0
        %1156 = vmatprep.subr.mxu0 0.0
        %1157 = vmatpush2.msra.mxu0 0.0
        %1158 = vmatprep.subr.mxu0 0.0
        %1159 = vmatpush2.msra.mxu0 0.0
        %1160 = vmatprep.subr.mxu0 0.0
        %1161 = vmatpush2.msra.mxu0 0.0
        %1162 = vmatprep.subr.mxu0 0.0
        %1163 = vmatpush2.msra.mxu0 0.0
        %1164 = vmatprep.subr.mxu0 0.0
        %1165 = vmatpush2.msra.mxu0 0.0
        %1166 = vmatprep.subr.mxu0 0.0
        %1167 = vmatpush2.msra.mxu0 0.0
        %1168 = vmatprep.subr.mxu0 0.0
        %1169 = vmatpush2.msra.mxu0 0.0
        %1170 = vmatprep.subr.mxu0 0.0
        %1171 = vmatpush2.msra.mxu0 0.0
        %1172 = vmatprep.subr.mxu0 0.0
        %1173 = vmatpush2.msra.mxu0 0.0
        %1174 = vmatprep.subr.mxu0 0.0
        %1175 = vmatpush2.msra.mxu0 0.0
        %1176 = vmatprep.subr.mxu0 0.0
        %1177 = vmatpush2.msra.mxu0 0.0
        %1178 = vmatprep.subr.mxu0 0.0
        %1179 = vmatpush2.msra.mxu0 0.0
        %1180 = vmatprep.mubr.f32.mxu0 0.0
        %1181 = vmatmul.mubr.f32.gmra.mxu0 %v1083
        %v1182 = vpop.f32.mrf.mxu0
        %v1183 = vadd.f32 %v1114, %v1182
        %v1184 = vpop.f32.mrf.mxu0
        %1185 = vmatprep.mubr.f32.mxu0 0.0
        %1186 = vmatmul.mubr.f32.gmra.mxu0 %v1088
        %v1187 = vpop.f32.mrf.mxu0
        %v1188 = vadd.f32 %v1114, %v1187
        %v1189 = vpop.f32.mrf.mxu0
        %1190 = vdwg.mxu0
        %v1191 = vmax.f32 %v1183, 0.0
        %v1192 = vmax.f32 %v1188, 0.0
        %v1193 = vld [vmem:[#allocation13] sm:$0xff]
        %v1194 = vld [vmem:[#allocation13 + $0x8] sm:$0xff]
        %v1195 = vld [vmem:[#allocation13 + $0x10] sm:$0xff]
        %v1196 = vld [vmem:[#allocation13 + $0x18] sm:$0xff]
        %v1197 = vld [vmem:[#allocation13 + $0x20] sm:$0xff]
        %v1198 = vld [vmem:[#allocation13 + $0x28] sm:$0xff]
        %v1199 = vld [vmem:[#allocation13 + $0x30] sm:$0xff]
        %v1200 = vld [vmem:[#allocation13 + $0x38] sm:$0xff]
        %v1201 = vld [vmem:[#allocation13 + $0x40] sm:$0xff]
        %v1202 = vld [vmem:[#allocation13 + $0x48] sm:$0xff]
        %v1203 = vld [vmem:[#allocation13 + $0x50] sm:$0xff]
        %v1204 = vld [vmem:[#allocation13 + $0x58] sm:$0xff]
        %v1205 = vld [vmem:[#allocation13 + $0x60] sm:$0xff]
        %v1206 = vld [vmem:[#allocation13 + $0x68] sm:$0xff]
        %v1207 = vld [vmem:[#allocation13 + $0x70] sm:$0xff]
        %v1208 = vld [vmem:[#allocation13 + $0x78] sm:$0xff]
        %v1209 = vld [vmem:[%s12] sm:$0x1]
        %v1211 = vlaneseq
        %v1212 = vshrl.u32 %v1211, 7
        %v1213 = vsub.s32 0, %v1212
        %v1214 = vrot.slane %v1209, %v1213
        %1216 = vmatprep.subr.mxu0 0.0
        %1217 = vmatpush1.msra.mxu0 %v1208
        %1218 = vmatprep.subr.mxu0 0.0
        %1219 = vmatpush1.msra.mxu0 %v1207
        %1220 = vmatprep.subr.mxu0 0.0
        %1221 = vmatpush1.msra.mxu0 %v1206
        %1222 = vmatprep.subr.mxu0 0.0
        %1223 = vmatpush1.msra.mxu0 %v1205
        %1224 = vmatprep.subr.mxu0 0.0
        %1225 = vmatpush1.msra.mxu0 %v1204
        %1226 = vmatprep.subr.mxu0 0.0
        %1227 = vmatpush1.msra.mxu0 %v1203
        %1228 = vmatprep.subr.mxu0 0.0
        %1229 = vmatpush1.msra.mxu0 %v1202
        %1230 = vmatprep.subr.mxu0 0.0
        %1231 = vmatpush1.msra.mxu0 %v1201
        %1232 = vmatprep.subr.mxu0 0.0
        %1233 = vmatpush1.msra.mxu0 %v1200
        %1234 = vmatprep.subr.mxu0 0.0
        %1235 = vmatpush1.msra.mxu0 %v1199
        %1236 = vmatprep.subr.mxu0 0.0
        %1237 = vmatpush1.msra.mxu0 %v1198
        %1238 = vmatprep.subr.mxu0 0.0
        %1239 = vmatpush1.msra.mxu0 %v1197
        %1240 = vmatprep.subr.mxu0 0.0
        %1241 = vmatpush1.msra.mxu0 %v1196
        %1242 = vmatprep.subr.mxu0 0.0
        %1243 = vmatpush1.msra.mxu0 %v1195
        %1244 = vmatprep.subr.mxu0 0.0
        %1245 = vmatpush1.msra.mxu0 %v1194
        %1246 = vmatprep.subr.mxu0 0.0
        %1247 = vmatpush1.msra.mxu0 %v1193
        %1248 = vmatprep.subr.mxu0 0.0
        %1249 = vmatpush2.msra.mxu0 0.0
        %1250 = vmatprep.subr.mxu0 0.0
        %1251 = vmatpush2.msra.mxu0 0.0
        %1252 = vmatprep.subr.mxu0 0.0
        %1253 = vmatpush2.msra.mxu0 0.0
        %1254 = vmatprep.subr.mxu0 0.0
        %1255 = vmatpush2.msra.mxu0 0.0
        %1256 = vmatprep.subr.mxu0 0.0
        %1257 = vmatpush2.msra.mxu0 0.0
        %1258 = vmatprep.subr.mxu0 0.0
        %1259 = vmatpush2.msra.mxu0 0.0
        %1260 = vmatprep.subr.mxu0 0.0
        %1261 = vmatpush2.msra.mxu0 0.0
        %1262 = vmatprep.subr.mxu0 0.0
        %1263 = vmatpush2.msra.mxu0 0.0
        %1264 = vmatprep.subr.mxu0 0.0
        %1265 = vmatpush2.msra.mxu0 0.0
        %1266 = vmatprep.subr.mxu0 0.0
        %1267 = vmatpush2.msra.mxu0 0.0
        %1268 = vmatprep.subr.mxu0 0.0
        %1269 = vmatpush2.msra.mxu0 0.0
        %1270 = vmatprep.subr.mxu0 0.0
        %1271 = vmatpush2.msra.mxu0 0.0
        %1272 = vmatprep.subr.mxu0 0.0
        %1273 = vmatpush2.msra.mxu0 0.0
        %1274 = vmatprep.subr.mxu0 0.0
        %1275 = vmatpush2.msra.mxu0 0.0
        %1276 = vmatprep.subr.mxu0 0.0
        %1277 = vmatpush2.msra.mxu0 0.0
        %1278 = vmatprep.subr.mxu0 0.0
        %1279 = vmatpush2.msra.mxu0 0.0
        %1280 = vmatprep.mubr.f32.mxu0 0.0
        %1281 = vmatmul.mubr.f32.gmra.mxu0 %v1191
        %v1282 = vpop.f32.mrf.mxu0
        %v1283 = vadd.f32 %v1214, %v1282
        %v1284 = vpop.f32.mrf.mxu0
        %1285 = vmatprep.mubr.f32.mxu0 0.0
        %1286 = vmatmul.mubr.f32.gmra.mxu0 %v1192
        %v1287 = vpop.f32.mrf.mxu0
        %v1288 = vadd.f32 %v1214, %v1287
        %v1289 = vpop.f32.mrf.mxu0
        %1290 = vdwg.mxu0
        %v1291 = vmax.f32 %v1283, 0.0
        %v1292 = vmax.f32 %v1288, 0.0
        %v1293 = vld [vmem:[#allocation14] sm:$0xff]
        %v1294 = vld [vmem:[#allocation14 + $0x8] sm:$0xff]
        %v1295 = vld [vmem:[#allocation14 + $0x10] sm:$0xff]
        %v1296 = vld [vmem:[#allocation14 + $0x18] sm:$0xff]
        %v1297 = vld [vmem:[#allocation14 + $0x20] sm:$0xff]
        %v1298 = vld [vmem:[#allocation14 + $0x28] sm:$0xff]
        %v1299 = vld [vmem:[#allocation14 + $0x30] sm:$0xff]
        %v1300 = vld [vmem:[#allocation14 + $0x38] sm:$0xff]
        %v1301 = vld [vmem:[#allocation14 + $0x40] sm:$0xff]
        %v1302 = vld [vmem:[#allocation14 + $0x48] sm:$0xff]
        %v1303 = vld [vmem:[#allocation14 + $0x50] sm:$0xff]
        %v1304 = vld [vmem:[#allocation14 + $0x58] sm:$0xff]
        %v1305 = vld [vmem:[#allocation14 + $0x60] sm:$0xff]
        %v1306 = vld [vmem:[#allocation14 + $0x68] sm:$0xff]
        %v1307 = vld [vmem:[#allocation14 + $0x70] sm:$0xff]
        %v1308 = vld [vmem:[#allocation14 + $0x78] sm:$0xff]
        %v1309 = vld [vmem:[%s14] sm:$0x1]
        %v1311 = vlaneseq
        %v1312 = vshrl.u32 %v1311, 7
        %v1313 = vsub.s32 0, %v1312
        %v1314 = vrot.slane %v1309, %v1313
        %1316 = vmatprep.subr.mxu0 0.0
        %1317 = vmatpush1.msra.mxu0 %v1308
        %1318 = vmatprep.subr.mxu0 0.0
        %1319 = vmatpush1.msra.mxu0 %v1307
        %1320 = vmatprep.subr.mxu0 0.0
        %1321 = vmatpush1.msra.mxu0 %v1306
        %1322 = vmatprep.subr.mxu0 0.0
        %1323 = vmatpush1.msra.mxu0 %v1305
        %1324 = vmatprep.subr.mxu0 0.0
        %1325 = vmatpush1.msra.mxu0 %v1304
        %1326 = vmatprep.subr.mxu0 0.0
        %1327 = vmatpush1.msra.mxu0 %v1303
        %1328 = vmatprep.subr.mxu0 0.0
        %1329 = vmatpush1.msra.mxu0 %v1302
        %1330 = vmatprep.subr.mxu0 0.0
        %1331 = vmatpush1.msra.mxu0 %v1301
        %1332 = vmatprep.subr.mxu0 0.0
        %1333 = vmatpush1.msra.mxu0 %v1300
        %1334 = vmatprep.subr.mxu0 0.0
        %1335 = vmatpush1.msra.mxu0 %v1299
        %1336 = vmatprep.subr.mxu0 0.0
        %1337 = vmatpush1.msra.mxu0 %v1298
        %1338 = vmatprep.subr.mxu0 0.0
        %1339 = vmatpush1.msra.mxu0 %v1297
        %1340 = vmatprep.subr.mxu0 0.0
        %1341 = vmatpush1.msra.mxu0 %v1296
        %1342 = vmatprep.subr.mxu0 0.0
        %1343 = vmatpush1.msra.mxu0 %v1295
        %1344 = vmatprep.subr.mxu0 0.0
        %1345 = vmatpush1.msra.mxu0 %v1294
        %1346 = vmatprep.subr.mxu0 0.0
        %1347 = vmatpush1.msra.mxu0 %v1293
        %1348 = vmatprep.subr.mxu0 0.0
        %1349 = vmatpush2.msra.mxu0 0.0
        %1350 = vmatprep.subr.mxu0 0.0
        %1351 = vmatpush2.msra.mxu0 0.0
        %1352 = vmatprep.subr.mxu0 0.0
        %1353 = vmatpush2.msra.mxu0 0.0
        %1354 = vmatprep.subr.mxu0 0.0
        %1355 = vmatpush2.msra.mxu0 0.0
        %1356 = vmatprep.subr.mxu0 0.0
        %1357 = vmatpush2.msra.mxu0 0.0
        %1358 = vmatprep.subr.mxu0 0.0
        %1359 = vmatpush2.msra.mxu0 0.0
        %1360 = vmatprep.subr.mxu0 0.0
        %1361 = vmatpush2.msra.mxu0 0.0
        %1362 = vmatprep.subr.mxu0 0.0
        %1363 = vmatpush2.msra.mxu0 0.0
        %1364 = vmatprep.subr.mxu0 0.0
        %1365 = vmatpush2.msra.mxu0 0.0
        %1366 = vmatprep.subr.mxu0 0.0
        %1367 = vmatpush2.msra.mxu0 0.0
        %1368 = vmatprep.subr.mxu0 0.0
        %1369 = vmatpush2.msra.mxu0 0.0
        %1370 = vmatprep.subr.mxu0 0.0
        %1371 = vmatpush2.msra.mxu0 0.0
        %1372 = vmatprep.subr.mxu0 0.0
        %1373 = vmatpush2.msra.mxu0 0.0
        %1374 = vmatprep.subr.mxu0 0.0
        %1375 = vmatpush2.msra.mxu0 0.0
        %1376 = vmatprep.subr.mxu0 0.0
        %1377 = vmatpush2.msra.mxu0 0.0
        %1378 = vmatprep.subr.mxu0 0.0
        %1379 = vmatpush2.msra.mxu0 0.0
        %1380 = vmatprep.mubr.f32.mxu0 0.0
        %1381 = vmatmul.mubr.f32.gmra.mxu0 %v1291
        %v1382 = vpop.f32.mrf.mxu0
        %v1383 = vadd.f32 %v1314, %v1382
        %v1384 = vpop.f32.mrf.mxu0
        %1385 = vmatprep.mubr.f32.mxu0 0.0
        %1386 = vmatmul.mubr.f32.gmra.mxu0 %v1292
        %v1387 = vpop.f32.mrf.mxu0
        %v1388 = vadd.f32 %v1314, %v1387
        %v1389 = vpop.f32.mrf.mxu0
        %1390 = vdwg.mxu0
        %v1391 = vmax.f32 %v1383, 0.0
        %v1392 = vmax.f32 %v1388, 0.0
        %v1393 = vld [vmem:[#allocation16] sm:$0xff]
        %v1394 = vld [vmem:[#allocation16 + $0x8] sm:$0xff]
        %v1395 = vld [vmem:[#allocation16 + $0x10] sm:$0xff]
        %v1396 = vld [vmem:[#allocation16 + $0x18] sm:$0xff]
        %v1397 = vld [vmem:[#allocation16 + $0x20] sm:$0xff]
        %v1398 = vld [vmem:[#allocation16 + $0x28] sm:$0xff]
        %v1399 = vld [vmem:[#allocation16 + $0x30] sm:$0xff]
        %v1400 = vld [vmem:[#allocation16 + $0x38] sm:$0xff]
        %v1401 = vld [vmem:[#allocation16 + $0x40] sm:$0xff]
        %v1402 = vld [vmem:[#allocation16 + $0x48] sm:$0xff]
        %v1403 = vld [vmem:[#allocation16 + $0x50] sm:$0xff]
        %v1404 = vld [vmem:[#allocation16 + $0x58] sm:$0xff]
        %v1405 = vld [vmem:[#allocation16 + $0x60] sm:$0xff]
        %v1406 = vld [vmem:[#allocation16 + $0x68] sm:$0xff]
        %v1407 = vld [vmem:[#allocation16 + $0x70] sm:$0xff]
        %v1408 = vld [vmem:[#allocation16 + $0x78] sm:$0xff]
        %v1409 = vld [vmem:[%s16] sm:$0x1]
        %v1411 = vlaneseq
        %v1412 = vshrl.u32 %v1411, 7
        %v1413 = vsub.s32 0, %v1412
        %v1414 = vrot.slane %v1409, %v1413
        %1416 = vmatprep.subr.mxu0 0.0
        %1417 = vmatpush1.msra.mxu0 %v1408
        %1418 = vmatprep.subr.mxu0 0.0
        %1419 = vmatpush1.msra.mxu0 %v1407
        %1420 = vmatprep.subr.mxu0 0.0
        %1421 = vmatpush1.msra.mxu0 %v1406
        %1422 = vmatprep.subr.mxu0 0.0
        %1423 = vmatpush1.msra.mxu0 %v1405
        %1424 = vmatprep.subr.mxu0 0.0
        %1425 = vmatpush1.msra.mxu0 %v1404
        %1426 = vmatprep.subr.mxu0 0.0
        %1427 = vmatpush1.msra.mxu0 %v1403
        %1428 = vmatprep.subr.mxu0 0.0
        %1429 = vmatpush1.msra.mxu0 %v1402
        %1430 = vmatprep.subr.mxu0 0.0
        %1431 = vmatpush1.msra.mxu0 %v1401
        %1432 = vmatprep.subr.mxu0 0.0
        %1433 = vmatpush1.msra.mxu0 %v1400
        %1434 = vmatprep.subr.mxu0 0.0
        %1435 = vmatpush1.msra.mxu0 %v1399
        %1436 = vmatprep.subr.mxu0 0.0
        %1437 = vmatpush1.msra.mxu0 %v1398
        %1438 = vmatprep.subr.mxu0 0.0
        %1439 = vmatpush1.msra.mxu0 %v1397
        %1440 = vmatprep.subr.mxu0 0.0
        %1441 = vmatpush1.msra.mxu0 %v1396
        %1442 = vmatprep.subr.mxu0 0.0
        %1443 = vmatpush1.msra.mxu0 %v1395
        %1444 = vmatprep.subr.mxu0 0.0
        %1445 = vmatpush1.msra.mxu0 %v1394
        %1446 = vmatprep.subr.mxu0 0.0
        %1447 = vmatpush1.msra.mxu0 %v1393
        %1448 = vmatprep.subr.mxu0 0.0
        %1449 = vmatpush2.msra.mxu0 0.0
        %1450 = vmatprep.subr.mxu0 0.0
        %1451 = vmatpush2.msra.mxu0 0.0
        %1452 = vmatprep.subr.mxu0 0.0
        %1453 = vmatpush2.msra.mxu0 0.0
        %1454 = vmatprep.subr.mxu0 0.0
        %1455 = vmatpush2.msra.mxu0 0.0
        %1456 = vmatprep.subr.mxu0 0.0
        %1457 = vmatpush2.msra.mxu0 0.0
        %1458 = vmatprep.subr.mxu0 0.0
        %1459 = vmatpush2.msra.mxu0 0.0
        %1460 = vmatprep.subr.mxu0 0.0
        %1461 = vmatpush2.msra.mxu0 0.0
        %1462 = vmatprep.subr.mxu0 0.0
        %1463 = vmatpush2.msra.mxu0 0.0
        %1464 = vmatprep.subr.mxu0 0.0
        %1465 = vmatpush2.msra.mxu0 0.0
        %1466 = vmatprep.subr.mxu0 0.0
        %1467 = vmatpush2.msra.mxu0 0.0
        %1468 = vmatprep.subr.mxu0 0.0
        %1469 = vmatpush2.msra.mxu0 0.0
        %1470 = vmatprep.subr.mxu0 0.0
        %1471 = vmatpush2.msra.mxu0 0.0
        %1472 = vmatprep.subr.mxu0 0.0
        %1473 = vmatpush2.msra.mxu0 0.0
        %1474 = vmatprep.subr.mxu0 0.0
        %1475 = vmatpush2.msra.mxu0 0.0
        %1476 = vmatprep.subr.mxu0 0.0
        %1477 = vmatpush2.msra.mxu0 0.0
        %1478 = vmatprep.subr.mxu0 0.0
        %1479 = vmatpush2.msra.mxu0 0.0
        %1480 = vmatprep.mubr.f32.mxu0 0.0
        %1481 = vmatmul.mubr.f32.gmra.mxu0 %v1391
        %v1482 = vpop.f32.mrf.mxu0
        %v1483 = vadd.f32 %v1414, %v1482
        %v1484 = vpop.f32.mrf.mxu0
        %1485 = vmatprep.mubr.f32.mxu0 0.0
        %1486 = vmatmul.mubr.f32.gmra.mxu0 %v1392
        %v1487 = vpop.f32.mrf.mxu0
        %v1488 = vadd.f32 %v1414, %v1487
        %v1489 = vpop.f32.mrf.mxu0
        %1490 = vdwg.mxu0
        %1491 = vst [vmem:[%s682] sm:$0xff] %v1483
        %1492 = vst [vmem:[%s682 + $0x28] sm:$0xff] %v1488
        %s1493 = sand.u32 %s408, 1
        %s1494 = scalar_lea.sflag [#allocation4], %s1493
        %s1495 = sand.u32 %s408, 1
        %s1496 = smul.addr %s1495, 80
        %s1497 = scalar_lea.vmem [#allocation17], %s1496
        // Predicated region
        $region125: #{tpu_custom_call.1} parent=87 // pred_check
          %p1498 = pneg %p418
        $region126: #{tpu_custom_call.1} parent=87 // pred_check_branch
          %1500 = sbr.rel (%p1498) target = $region128
        $region127: #{tpu_custom_call.1} parent=87 // pred_region
          %s1501 = smul.u32 2, %s38
          %s1503 = ssub.s32 1280, 1280
          %1504 = vsyncadd %s1494, %s1503
          %s1505 = smul.addr %s1501, 5
          %s1506 = smul.addr %s1505, 128
          %s1507 = scalar_lea.hbm %s17, %s1506
          %s1508 = sshll.u32 %s1497, 4
          %s1509 = int_to_ptr.vmem [resolvable:$true] %s1508
          %1514 = dma.vmem_to_hbm [thread:$0]  %s1509, 1280, %s1507, %s1494, 640, 640, 40
        $region128: #{tpu_custom_call.1} parent=87 // pred_fallthru
          _
      $region88: #{tpu_custom_call.1} parent=5 // pred_fallthru
        _
      %p1515 = scmp.le.s32.totalorder 2, %s33
      // Predicated region
      $region129: #{tpu_custom_call.1} parent=5 // pred_check
        %p1516 = pneg %p1515
      $region130: #{tpu_custom_call.1} parent=5 // pred_check_branch
        %1518 = sbr.rel (%p1516) target = $region132
      $region131: #{tpu_custom_call.1} parent=5 // pred_region
        %s1519 = ssub.s32 %s33, 2
        // Predicated region
        $region133: #{tpu_custom_call.1} parent=131 // pred_check
          %p1520 = pneg %p424
        $region134: #{tpu_custom_call.1} parent=131 // pred_check_branch
          %1522 = sbr.rel (%p1520) target = $region136
        $region135: #{tpu_custom_call.1} parent=131 // pred_region
          %s1523 = sand.u32 %s409, 1
          %s1524 = scalar_lea.sflag [#allocation4], %s1523
          %s1525 = sand.u32 %s409, 1
          %s1526 = smul.addr %s1525, 80
          %s1527 = scalar_lea.vmem [#allocation17], %s1526
          %1528 = dma.done %s1524, 1280
        $region136: #{tpu_custom_call.1} parent=131 // pred_fallthru
          _
      $region132: #{tpu_custom_call.1} parent=5 // pred_fallthru
        _
    $region6: #{tpu_custom_call.1} parent=1 // loop_footer
      %s37 = sadd.s32 1, %s33
    $region7: #{tpu_custom_call.1} parent=1 // loop_footer_branch
      %32 = sbr.rel target = $region3
    $region8: #{tpu_custom_call.1} parent=1 // loop_exit
      _
    %1529 = vsyncpa [#allocation3], 1
    %s1530 = scalar_lea.sflag [#allocation3], 1
    %1531 = vsyncpa %s1530, 1
    %1532 = vsyncpa [#allocation6], 1
    %1533 = vsyncpa [#allocation9], 1
    %1534 = vsyncpa [#allocation12], 1
    %1535 = vsyncpa [#allocation15], 1
    %1536 = vsyncpa [#allocation4], 1
    %s1537 = scalar_lea.sflag [#allocation4], 1
    %1538 = vsyncpa %s1537, 1

</llo_original>
